<compile_context>
chip_gen: v6e
topology: v6e:2x2x1
jax: 0.10.0
libtpu: 0.0.40
codegen_flags: <defaults>
</compile_context>

<pallas_src>
import jax
import jax.numpy as jnp
from jax.experimental import pallas as pl
from jax.experimental.pallas import tpu as pltpu

D_MODEL = 512
D_HIDDEN = 4 * D_MODEL          # 2048
TILE_M_DEFAULT = 1024           # token rows per grid step (multiple of 8)
TILE_K_STREAM = 512             # hidden-dim chunk for the small-M path
VMEM_LIMIT = 48 * 1024 * 1024   # > scoped defaults, < v7x's 64 MiB physical


def _round_up(x, n):
    return ((x + n - 1) // n) * n


def _cdiv(a, b):
    return -(-a // b)


# ----------------------------------------------------------------------------
# Kernels
# ----------------------------------------------------------------------------
def _ffn_resident_kernel(x_ref, w1_ref, b1_ref, w2_ref, b2_ref, o_ref):
    """One grid step = one (tile_m, 512) token tile; both weights VMEM-resident.

      h   = relu(x @ W1 + b1)  -> bf16         (tile_m, 2048)
      out = h @ W2 + b2        -> f32 accum    (tile_m, 512)
    """
    x = x_ref[...].astype(jnp.bfloat16)                          # bf16 MXU operand
    h = jnp.dot(x, w1_ref[...], preferred_element_type=jnp.float32)
    # Fused epilogue: bias + ReLU + downcast -> only a bf16 h temp materializes.
    h = jnp.maximum(h + b1_ref[...], 0.0).astype(jnp.bfloat16)
    out = jnp.dot(h, w2_ref[...], preferred_element_type=jnp.float32)
    out = out + b2_ref[...]
    # Dropout(p=0.1) is identity in eval mode.
    o_ref[...] = out.astype(o_ref.dtype)


def _ffn_stream_kernel(x_ref, w1_ref, b1_ref, w2_ref, b2_ref, o_ref, acc_ref):
    """Small-M (decode-style) path: a single resident token tile while the grid
    streams the hidden dim in TILE_K_STREAM-wide chunks, overlapping the weight
    DMA with MXU work."""
    k = pl.program_id(0)

    @pl.when(k == 0)
    def _():
        acc_ref[...] = jnp.zeros_like(acc_ref)

    x = x_ref[...].astype(jnp.bfloat16)
    h = jnp.dot(x, w1_ref[...], preferred_element_type=jnp.float32)
    h = jnp.maximum(h + b1_ref[...], 0.0).astype(jnp.bfloat16)
    acc_ref[...] += jnp.dot(h, w2_ref[...], preferred_element_type=jnp.float32)

    @pl.when(k == pl.num_programs(0) - 1)
    def _():
        o_ref[...] = (acc_ref[...] + b2_ref[...]).astype(o_ref.dtype)


# ----------------------------------------------------------------------------
# Wrapper
# ----------------------------------------------------------------------------
def prepare_ffn_params(w1, b1, w2, b2):
    """One-time parameter prep (hoisted out of the per-call wrapper):
    bf16 weights for the MXU, f32 (1, N) biases for the VPU epilogue."""
    return (w1.astype(jnp.bfloat16),
            b1.reshape(1, D_HIDDEN).astype(jnp.float32),
            w2.astype(jnp.bfloat16),
            b2.reshape(1, D_MODEL).astype(jnp.float32))


def _plan_tiles(m, max_tile):
    """Return (tile_m, m_pad, use_streaming)."""
    m8 = _round_up(m, 8)
    if m8 <= 256:
        return m8, m8, True                       # single small tile -> stream weights
    if m8 <= 2 * max_tile:
        t = _round_up(_cdiv(m8, 2), 8)            # exactly 2 tiles (megacore balance)
        return t, 2 * t, False
    # Large M: prefer a divisor of m8 (no padding), even tile count, large tiles.
    for want_even in (True, False):
        t = max_tile
        while t >= max_tile // 2:
            if m8 % t == 0 and ((m8 // t) % 2 == 0 or not want_even):
                return t, m8, False
            t -= 8
    n = _cdiv(m8, max_tile)
    n += n % 2                                    # even number of max-size tiles
    return max_tile, n * max_tile, False


def feed_forward_network(x, params, *, tile_m=TILE_M_DEFAULT):
    """x: (batch, seq, d_model) -> (batch, seq, d_model). params: prepare_ffn_params()."""
    w1_bf, b1_2d, w2_bf, b2_2d = params
    batch, seq, d_model = x.shape
    assert d_model == D_MODEL
    m = batch * seq
    x2d = x.reshape(m, d_model)

    tm, m_pad, use_streaming = _plan_tiles(m, tile_m)
    if m_pad != m:
        # Only hit when no padding-free tiling exists (costs one extra HBM pass).
        x2d = jnp.pad(x2d, ((0, m_pad - m), (0, 0)))

    resident = pl.Buffered(1)   # constant-index blocks: skip useless double-buffering

    if use_streaming:
        grid = (D_HIDDEN // TILE_K_STREAM,)
        out2d = pl.pallas_call(
            _ffn_stream_kernel,
            out_shape=jax.ShapeDtypeStruct((m_pad, d_model), x.dtype),
            grid_spec=pltpu.PrefetchScalarGridSpec(
                num_scalar_prefetch=0,
                grid=grid,
                in_specs=[
                    pl.BlockSpec((m_pad, D_MODEL), lambda k: (0, 0),
                                 pipeline_mode=resident),                      # x (resident)
                    pl.BlockSpec((D_MODEL, TILE_K_STREAM), lambda k: (0, k)),  # W1 chunk
                    pl.BlockSpec((1, TILE_K_STREAM), lambda k: (0, k)),        # b1 chunk
                    pl.BlockSpec((TILE_K_STREAM, D_MODEL), lambda k: (k, 0)),  # W2 chunk
                    pl.BlockSpec((1, D_MODEL), lambda k: (0, 0),
                                 pipeline_mode=resident),                      # b2
                ],
                out_specs=pl.BlockSpec((m_pad, D_MODEL), lambda k: (0, 0)),
                scratch_shapes=[pltpu.VMEM((m_pad, D_MODEL), jnp.float32)],
            ),
            compiler_params=pltpu.CompilerParams(
                dimension_semantics=("arbitrary",),      # hidden-dim reduction axis
                vmem_limit_bytes=VMEM_LIMIT,
            ),
        )(x2d, w1_bf, b1_2d, w2_bf, b2_2d)
    else:
        grid = (m_pad // tm,)
        out2d = pl.pallas_call(
            _ffn_resident_kernel,
            out_shape=jax.ShapeDtypeStruct((m_pad, d_model), x.dtype),
            grid_spec=pltpu.PrefetchScalarGridSpec(
                num_scalar_prefetch=0,
                grid=grid,
                in_specs=[
                    pl.BlockSpec((tm, D_MODEL), lambda i: (i, 0)),             # x tile
                    pl.BlockSpec((D_MODEL, D_HIDDEN), lambda i: (0, 0),
                                 pipeline_mode=resident),                      # W1 (resident)
                    pl.BlockSpec((1, D_HIDDEN), lambda i: (0, 0),
                                 pipeline_mode=resident),                      # b1
                    pl.BlockSpec((D_HIDDEN, D_MODEL), lambda i: (0, 0),
                                 pipeline_mode=resident),                      # W2 (resident)
                    pl.BlockSpec((1, D_MODEL), lambda i: (0, 0),
                                 pipeline_mode=resident),                      # b2
                ],
                out_specs=pl.BlockSpec((tm, D_MODEL), lambda i: (i, 0)),
            ),
            compiler_params=pltpu.CompilerParams(
                dimension_semantics=("parallel",),   # M tiles split across TCs (v7x)
                vmem_limit_bytes=VMEM_LIMIT,
            ),
        )(x2d, w1_bf, b1_2d, w2_bf, b2_2d)

    if m_pad != m:
        out2d = out2d[:m]
    return out2d.reshape(batch, seq, d_model)


# ----------------------------------------------------------------------------
# Parameter init (matches nn.Linear default: U(-1/sqrt(fan_in), +)) + reference
# ----------------------------------------------------------------------------
def init_params(key):
    k1, k2, k3, k4 = jax.random.split(key, 4)
    bound1 = 1.0 / (D_MODEL ** 0.5)
    bound2 = 1.0 / (D_HIDDEN ** 0.5)
    # Stored as (in, out) so the kernel does x @ W directly (== x @ weight.T for
    # PyTorch weight of shape (out, in)).
    w1 = jax.random.uniform(k1, (D_MODEL, D_HIDDEN), jnp.float32, -bound1, bound1)
    b1 = jax.random.uniform(k2, (D_HIDDEN,), jnp.float32, -bound1, bound1)
    w2 = jax.random.uniform(k3, (D_HIDDEN, D_MODEL), jnp.float32, -bound2, bound2)
    b2 = jax.random.uniform(k4, (D_MODEL,), jnp.float32, -bound2, bound2)
    return w1, b1, w2, b2


def _ref(x, w1, b1, w2, b2):
    # Pure-JAX f32 reference (eval-mode dropout = identity).
    return jnp.maximum(x @ w1 + b1, 0.0) @ w2 + b2


if __name__ == "__main__":
    key = jax.random.PRNGKey(0)
    kx, kp, kx2 = jax.random.split(key, 3)
    w1, b1, w2, b2 = init_params(kp)
    params = prepare_ffn_params(w1, b1, w2, b2)   # one-time bf16 cast / bias reshape

    # Small decode-style shape -> single token tile, hidden-dim streaming path.
    batch, seq = 2, 8
    x = jax.random.normal(kx, (batch, seq, D_MODEL), jnp.float32)
    out = jax.block_until_ready(feed_forward_network(x, params))
    ref = _ref(x, w1, b1, w2, b2)
    assert out.shape == (batch, seq, D_MODEL)
    # bf16 MXU operands with f32 accumulation -> loosen tolerance vs f32 ref.
    assert jnp.allclose(out, ref, atol=2e-2, rtol=2e-2)

    # Medium shape -> resident-weight path with 2 "parallel" M tiles (no padding).
    batch2, seq2 = 2, 256
    x2 = jax.random.normal(kx2, (batch2, seq2, D_MODEL), jnp.float32)
    out2 = jax.block_until_ready(feed_forward_network(x2, params))
    ref2 = _ref(x2, w1, b1, w2, b2)
    assert out2.shape == (batch2, seq2, D_MODEL)
    assert jnp.allclose(out2, ref2, atol=2e-2, rtol=2e-2)

    print("KERNEL_OK")
</pallas_src>

<mosaic_0001>
module attributes {stable_mosaic.version = 11 : i64} {
  func.func @_ffn_stream_kernel(%arg0: i32, %arg1: memref<16x512xf32, #tpu.memory_space<vmem>>, %arg2: memref<512x512xbf16, #tpu.memory_space<vmem>>, %arg3: memref<1x512xf32, #tpu.memory_space<vmem>>, %arg4: memref<512x512xbf16, #tpu.memory_space<vmem>>, %arg5: memref<1x512xf32, #tpu.memory_space<vmem>>, %arg6: memref<16x512xf32, #tpu.memory_space<vmem>>, %arg7: memref<16x512xf32, #tpu.memory_space<vmem>>) attributes {dimension_semantics = [#tpu.dimension_semantics<arbitrary>], iteration_bounds = array<i64: 4>, scalar_prefetch = 0 : i64, scratch_operands = 1 : i64, tpu.core_type = #tpu.core_type<tc>, window_params = [{pipeline_mode = #tpu.pipeline_mode<synchronous>, transform_indices = @transform_0, window_bounds = array<i64: 16, 512>}, {transform_indices = @transform_1, window_bounds = array<i64: 512, 512>}, {transform_indices = @transform_2, window_bounds = array<i64: 1, 512>}, {transform_indices = @transform_3, window_bounds = array<i64: 512, 512>}, {pipeline_mode = #tpu.pipeline_mode<synchronous>, transform_indices = @transform_4, window_bounds = array<i64: 1, 512>}, {pipeline_mode = #tpu.pipeline_mode<synchronous>, transform_indices = @transform_5, window_bounds = array<i64: 16, 512>}]} {
    %c0_i32 = arith.constant 0 : i32
    %0 = arith.cmpi eq, %arg0, %c0_i32 : i32
    %1 = arith.extui %0 : i1 to i32
    %c0_i32_0 = arith.constant 0 : i32
    %2 = arith.cmpi ne, %1, %c0_i32_0 : i32
    scf.if %2 {
      %cst_15 = arith.constant 0.000000e+00 : f32
      %21 = vector.broadcast %cst_15 : f32 to vector<16x512xf32>
      %c0_16 = arith.constant 0 : index
      %c0_17 = arith.constant 0 : index
      %22 = vector.load %arg7[%c0_16, %c0_17] : memref<16x512xf32, #tpu.memory_space<vmem>>, vector<16x512xf32>
      tpu.vector_store %arg7[%c0_16, %c0_17], %21 {strides = array<i32>} : memref<16x512xf32, #tpu.memory_space<vmem>>, vector<16x512xf32>,
    } else {
    }
    %c0 = arith.constant 0 : index
    %c0_1 = arith.constant 0 : index
    %3 = vector.load %arg1[%c0, %c0_1] : memref<16x512xf32, #tpu.memory_space<vmem>>, vector<16x512xf32>
    %4 = arith.truncf %3 : vector<16x512xf32> to vector<16x512xbf16>
    %c0_2 = arith.constant 0 : index
    %c0_3 = arith.constant 0 : index
    %5 = vector.load %arg2[%c0_2, %c0_3] : memref<512x512xbf16, #tpu.memory_space<vmem>>, vector<512x512xbf16>
    %cst = arith.constant dense<0.000000e+00> : vector<16x512xf32>
    %6 = tpu.matmul %4, %5, %cst {dimension_numbers = #tpu.dot_dimension_numbers<[1], [0], [0], [1], [0, 0, 1, 1], [], []>} : vector<16x512xbf16>, vector<512x512xbf16>, vector<16x512xf32> -> vector<16x512xf32>
    %c0_4 = arith.constant 0 : index
    %c0_5 = arith.constant 0 : index
    %7 = vector.load %arg3[%c0_4, %c0_5] : memref<1x512xf32, #tpu.memory_space<vmem>>, vector<1x512xf32>
    %8 = vector.broadcast %7 : vector<1x512xf32> to vector<16x512xf32>
    %9 = arith.addf %6, %8 : vector<16x512xf32>
    %cst_6 = arith.constant 0.000000e+00 : f32
    %10 = vector.broadcast %cst_6 : f32 to vector<16x512xf32>
    %11 = arith.maximumf %9, %10 : vector<16x512xf32>
    %12 = arith.truncf %11 : vector<16x512xf32> to vector<16x512xbf16>
    %c0_7 = arith.constant 0 : index
    %c0_8 = arith.constant 0 : index
    %13 = vector.load %arg7[%c0_7, %c0_8] : memref<16x512xf32, #tpu.memory_space<vmem>>, vector<16x512xf32>
    %c0_9 = arith.constant 0 : index
    %c0_10 = arith.constant 0 : index
    %14 = vector.load %arg4[%c0_9, %c0_10] : memref<512x512xbf16, #tpu.memory_space<vmem>>, vector<512x512xbf16>
    %cst_11 = arith.constant dense<0.000000e+00> : vector<16x512xf32>
    %15 = tpu.matmul %12, %14, %cst_11 {dimension_numbers = #tpu.dot_dimension_numbers<[1], [0], [0], [1], [0, 0, 1, 1], [], []>} : vector<16x512xbf16>, vector<512x512xbf16>, vector<16x512xf32> -> vector<16x512xf32>
    %16 = arith.addf %13, %15 : vector<16x512xf32>
    %c0_12 = arith.constant 0 : index
    %c0_13 = arith.constant 0 : index
    %17 = vector.load %arg7[%c0_12, %c0_13] : memref<16x512xf32, #tpu.memory_space<vmem>>, vector<16x512xf32>
    tpu.vector_store %arg7[%c0_12, %c0_13], %16 {strides = array<i32>} : memref<16x512xf32, #tpu.memory_space<vmem>>, vector<16x512xf32>,
    %c3_i32 = arith.constant 3 : i32
    %18 = arith.cmpi eq, %arg0, %c3_i32 : i32
    %19 = arith.extui %18 : i1 to i32
    %c0_i32_14 = arith.constant 0 : i32
    %20 = arith.cmpi ne, %19, %c0_i32_14 : i32
    scf.if %20 {
      %c0_15 = arith.constant 0 : index
      %c0_16 = arith.constant 0 : index
      %21 = vector.load %arg7[%c0_15, %c0_16] : memref<16x512xf32, #tpu.memory_space<vmem>>, vector<16x512xf32>
      %c0_17 = arith.constant 0 : index
      %c0_18 = arith.constant 0 : index
      %22 = vector.load %arg5[%c0_17, %c0_18] : memref<1x512xf32, #tpu.memory_space<vmem>>, vector<1x512xf32>
      %23 = vector.broadcast %22 : vector<1x512xf32> to vector<16x512xf32>
      %24 = arith.addf %21, %23 : vector<16x512xf32>
      %c0_19 = arith.constant 0 : index
      %c0_20 = arith.constant 0 : index
      %25 = vector.load %arg6[%c0_19, %c0_20] : memref<16x512xf32, #tpu.memory_space<vmem>>, vector<16x512xf32>
      tpu.vector_store %arg6[%c0_19, %c0_20], %24 {strides = array<i32>} : memref<16x512xf32, #tpu.memory_space<vmem>>, vector<16x512xf32>,
    } else {
    }
    return
  }
  func.func @transform_0(%arg0: i32) -> (i32, i32) {
    %c0_i32 = arith.constant 0 : i32
    %c0_i32_0 = arith.constant 0 : i32
    %c0_i32_1 = arith.constant 0 : i32
    return %c0_i32, %c0_i32_0 : i32, i32
  }
  func.func @transform_1(%arg0: i32) -> (i32, i32) {
    %c0_i32 = arith.constant 0 : i32
    %c0_i32_0 = arith.constant 0 : i32
    return %c0_i32, %arg0 : i32, i32
  }
  func.func @transform_2(%arg0: i32) -> (i32, i32) {
    %c0_i32 = arith.constant 0 : i32
    %c0_i32_0 = arith.constant 0 : i32
    return %c0_i32, %arg0 : i32, i32
  }
  func.func @transform_3(%arg0: i32) -> (i32, i32) {
    %c0_i32 = arith.constant 0 : i32
    %c0_i32_0 = arith.constant 0 : i32
    return %arg0, %c0_i32 : i32, i32
  }
  func.func @transform_4(%arg0: i32) -> (i32, i32) {
    %c0_i32 = arith.constant 0 : i32
    %c0_i32_0 = arith.constant 0 : i32
    %c0_i32_1 = arith.constant 0 : i32
    return %c0_i32, %c0_i32_0 : i32, i32
  }
  func.func @transform_5(%arg0: i32) -> (i32, i32) {
    %c0_i32 = arith.constant 0 : i32
    %c0_i32_0 = arith.constant 0 : i32
    %c0_i32_1 = arith.constant 0 : i32
    return %c0_i32, %c0_i32_0 : i32, i32
  }
}

</mosaic_0001>

<llo_original>
// kernel: tpu_custom_call.1
$region0: #{tpu_custom_call.1}
  #allocation0 [shape = 'u32[]', space=smem, size = 0x4, offset = 0x4, fixed_abs, tag = 'smem constant byte address 0x4 - core index']
  #allocation1 [shape = 'u32[144,128]{1,0:T(1,128)}', space=vmem, size = 0x12000, scoped, tag = 'internal scratch']
  #allocation2 [shape = 'f32[16,512]{1,0:T(8,128)}', space=vmem, size = 0x8000, scoped, tag = 'scratch operand']
  %s0 = inlined_call_operand.hbm [shape: f32[16,512], index: 0, kind: input, shape index: {}]
  %s1 = inlined_call_operand.hbm [shape: bf16[512,2048], index: 1, kind: input, shape index: {}]
  %s2 = inlined_call_operand.hbm [shape: f32[1,2048], index: 2, kind: input, shape index: {}]
  %s3 = inlined_call_operand.hbm [shape: bf16[2048,512], index: 3, kind: input, shape index: {}]
  %s4 = inlined_call_operand.hbm [shape: f32[1,512], index: 4, kind: input, shape index: {}]
  %s5 = inlined_call_operand.hbm [shape: f32[16,512], index: 5, kind: output, shape index: {}]
  %s6 = sld [smem:[#allocation0]]
  $region81: #{tpu_custom_call.1} parent=0
    _
  %s8 = ssub.s32 1, %s6
  %s9 = scalar_select 0, %s8, %s6
  $region1: #{tpu_custom_call.1} parent=0
    #allocation3 [shape = 'u8[32768]{0}', space=vmem, size = 0x8000, scoped, tag = 'input window, operand 0, single buffered']
    #allocation4 [shape = 's32[2]{0}', space=sflag, size = 0x8, scoped, tag = 'scoped memory for tpu_custom_call.1']
    #allocation5 [shape = 's32[2]{0}', space=sflag, size = 0x8, scoped, tag = 'scoped memory for tpu_custom_call.1']
    #allocation6 [shape = 'u8[1048576]{0}', space=vmem, size = 0x100000, scoped, tag = 'input window, operand 1']
    #allocation7 [shape = 's32[2]{0}', space=sflag, size = 0x8, scoped, tag = 'scoped memory for tpu_custom_call.1']
    #allocation8 [shape = 'u8[4096]{0}', space=vmem, size = 0x1000, scoped, tag = 'input window, operand 2']
    #allocation9 [shape = 'u8[1048576]{0}', space=vmem, size = 0x100000, scoped, tag = 'input window, operand 3']
    #allocation10 [shape = 's32[2]{0}', space=sflag, size = 0x8, scoped, tag = 'scoped memory for tpu_custom_call.1']
    #allocation11 [shape = 'u8[2048]{0}', space=vmem, size = 0x800, scoped, tag = 'input window, operand 4, single buffered']
    #allocation12 [shape = 'u8[32768]{0}', space=vmem, size = 0x8000, scoped, tag = 'output window, operand 0, single buffered']
    %10 = vsyncpa [#allocation4], 0
    %11 = vsyncpa [#allocation7], 0
    %s12 = scalar_lea.sflag [#allocation7], 1
    %13 = vsyncpa %s12, 0
    %14 = vsyncpa [#allocation10], 0
    %s15 = scalar_lea.sflag [#allocation10], 1
    %16 = vsyncpa %s15, 0
    %17 = vsyncpa [#allocation5], 0
    loop: start=0, step=1, limit=6
    $region2: #{tpu_custom_call.1} parent=1 // loop_pre_header
      _
    $region3: #{tpu_custom_call.1} parent=1 // loop_header
      %s19 = sphi 0, %s23
      %p20 = scmp.ge.s32.totalorder %s19, 6
      %s27 = sphi 0, %s27
      %s29 = sphi 0, %s27
      %s30 = sphi 0, %s29
      %s44 = sphi 0, %s30
      %s50 = sphi 0, %s52
      %s53 = sphi 0, %s50
      %s54 = sphi 0, %s53
      %s70 = sphi 0, %s54
      %s76 = sphi 0, %s78
      %s79 = sphi 0, %s76
      %s80 = sphi 0, %s79
      %s96 = sphi 0, %s80
      %s102 = sphi 0, %s104
      %s105 = sphi 0, %s102
      %s106 = sphi 0, %s105
      %s122 = sphi 0, %s106
      %s126 = sphi 0, %s126
      %s128 = sphi 0, %s126
      %s129 = sphi 0, %s128
      %s143 = sphi 0, %s129
      %s147 = sphi 0, %s147
      %s149 = sphi 0, %s147
      %s150 = sphi 0, %s149
      %s164 = sphi 0, %s150
    $region4: #{tpu_custom_call.1} parent=1 // loop_header_branch
      %22 = sbr.rel (%p20) target = $region8
    $region5: #{tpu_custom_call.1} parent=1 // loop_body
      %s24 = ssub.s32 %s19, 1
      %s25 = ssub.s32 %s19, 2
      %s26 = sadd.s32 %s19, 1
      %s28 = sadd.s32 %s27, 1
      %p31 = scmp.eq.s32.totalorder %s19, 3
      %p32 = scmp.ne.s32.totalorder %s27, %s29
      %p33 = scmp.eq.s32.totalorder %s19, 0
      %p34 = por %p32, %p33
      %p35 = scmp.ne.s32.totalorder %s27, %s29
      %p36 = scmp.eq.s32.totalorder %s24, 3
      %p37 = por %p35, %p36
      %p38 = scmp.ne.s32.totalorder %s29, %s30
      %p39 = scmp.eq.s32.totalorder %s24, 0
      %p40 = por %p38, %p39
      %p41 = scmp.ne.s32.totalorder %s29, %s30
      %p42 = scmp.eq.s32.totalorder %s25, 3
      %p43 = por %p41, %p42
      %p45 = scmp.ne.s32.totalorder %s30, %s44
      %p46 = scmp.eq.s32.totalorder %s25, 0
      %p47 = por %p45, %p46
      %s48 = ssub.s32 %s19, %s26
      %p49 = scmp.eq.s32.totalorder %s48, 0
      %s51 = sadd.s32 %s50, 1
      %s52 = scalar_select %p49, %s50, %s51
      %p55 = pneg %p49
      %p56 = scmp.eq.s32.totalorder %s19, 3
      %p57 = por %p55, %p56
      %p58 = scmp.ne.s32.totalorder %s50, %s53
      %p59 = scmp.eq.s32.totalorder %s19, 0
      %p60 = por %p58, %p59
      %p61 = scmp.ne.s32.totalorder %s50, %s53
      %p62 = scmp.eq.s32.totalorder %s24, 3
      %p63 = por %p61, %p62
      %p64 = scmp.ne.s32.totalorder %s53, %s54
      %p65 = scmp.eq.s32.totalorder %s24, 0
      %p66 = por %p64, %p65
      %p67 = scmp.ne.s32.totalorder %s53, %s54
      %p68 = scmp.eq.s32.totalorder %s25, 3
      %p69 = por %p67, %p68
      %p71 = scmp.ne.s32.totalorder %s54, %s70
      %p72 = scmp.eq.s32.totalorder %s25, 0
      %p73 = por %p71, %p72
      %s74 = ssub.s32 %s19, %s26
      %p75 = scmp.eq.s32.totalorder %s74, 0
      %s77 = sadd.s32 %s76, 1
      %s78 = scalar_select %p75, %s76, %s77
      %p81 = pneg %p75
      %p82 = scmp.eq.s32.totalorder %s19, 3
      %p83 = por %p81, %p82
      %p84 = scmp.ne.s32.totalorder %s76, %s79
      %p85 = scmp.eq.s32.totalorder %s19, 0
      %p86 = por %p84, %p85
      %p87 = scmp.ne.s32.totalorder %s76, %s79
      %p88 = scmp.eq.s32.totalorder %s24, 3
      %p89 = por %p87, %p88
      %p90 = scmp.ne.s32.totalorder %s79, %s80
      %p91 = scmp.eq.s32.totalorder %s24, 0
      %p92 = por %p90, %p91
      %p93 = scmp.ne.s32.totalorder %s79, %s80
      %p94 = scmp.eq.s32.totalorder %s25, 3
      %p95 = por %p93, %p94
      %p97 = scmp.ne.s32.totalorder %s80, %s96
      %p98 = scmp.eq.s32.totalorder %s25, 0
      %p99 = por %p97, %p98
      %s100 = ssub.s32 %s19, %s26
      %p101 = scmp.eq.s32.totalorder %s100, 0
      %s103 = sadd.s32 %s102, 1
      %s104 = scalar_select %p101, %s102, %s103
      %p107 = pneg %p101
      %p108 = scmp.eq.s32.totalorder %s19, 3
      %p109 = por %p107, %p108
      %p110 = scmp.ne.s32.totalorder %s102, %s105
      %p111 = scmp.eq.s32.totalorder %s19, 0
      %p112 = por %p110, %p111
      %p113 = scmp.ne.s32.totalorder %s102, %s105
      %p114 = scmp.eq.s32.totalorder %s24, 3
      %p115 = por %p113, %p114
      %p116 = scmp.ne.s32.totalorder %s105, %s106
      %p117 = scmp.eq.s32.totalorder %s24, 0
      %p118 = por %p116, %p117
      %p119 = scmp.ne.s32.totalorder %s105, %s106
      %p120 = scmp.eq.s32.totalorder %s25, 3
      %p121 = por %p119, %p120
      %p123 = scmp.ne.s32.totalorder %s106, %s122
      %p124 = scmp.eq.s32.totalorder %s25, 0
      %p125 = por %p123, %p124
      %s127 = sadd.s32 %s126, 1
      %p130 = scmp.eq.s32.totalorder %s19, 3
      %p131 = scmp.ne.s32.totalorder %s126, %s128
      %p132 = scmp.eq.s32.totalorder %s19, 0
      %p133 = por %p131, %p132
      %p134 = scmp.ne.s32.totalorder %s126, %s128
      %p135 = scmp.eq.s32.totalorder %s24, 3
      %p136 = por %p134, %p135
      %p137 = scmp.ne.s32.totalorder %s128, %s129
      %p138 = scmp.eq.s32.totalorder %s24, 0
      %p139 = por %p137, %p138
      %p140 = scmp.ne.s32.totalorder %s128, %s129
      %p141 = scmp.eq.s32.totalorder %s25, 3
      %p142 = por %p140, %p141
      %p144 = scmp.ne.s32.totalorder %s129, %s143
      %p145 = scmp.eq.s32.totalorder %s25, 0
      %p146 = por %p144, %p145
      %s148 = sadd.s32 %s147, 1
      %p151 = scmp.eq.s32.totalorder %s19, 3
      %p152 = scmp.ne.s32.totalorder %s147, %s149
      %p153 = scmp.eq.s32.totalorder %s19, 0
      %p154 = por %p152, %p153
      %p155 = scmp.ne.s32.totalorder %s147, %s149
      %p156 = scmp.eq.s32.totalorder %s24, 3
      %p157 = por %p155, %p156
      %p158 = scmp.ne.s32.totalorder %s149, %s150
      %p159 = scmp.eq.s32.totalorder %s24, 0
      %p160 = por %p158, %p159
      %p161 = scmp.ne.s32.totalorder %s149, %s150
      %p162 = scmp.eq.s32.totalorder %s25, 3
      %p163 = por %p161, %p162
      %p165 = scmp.ne.s32.totalorder %s150, %s164
      %p166 = scmp.eq.s32.totalorder %s25, 0
      %p167 = por %p165, %p166
      %p168 = scmp.le.s32.totalorder 1, %s19
      %p169 = scmp.lt.s32.totalorder %s19, 5
      %p170 = pnand %p168, %p169
      %p171 = pneg %p170
      // Predicated region
      $region9: #{tpu_custom_call.1} parent=5 // pred_check
        _
      $region10: #{tpu_custom_call.1} parent=5 // pred_check_branch
        %173 = sbr.rel (%p170) target = $region12
      $region11: #{tpu_custom_call.1} parent=5 // pred_region
        %s174 = ssub.s32 %s19, 1
        // Predicated region
        $region13: #{tpu_custom_call.1} parent=11 // pred_check
          %p175 = pneg %p40
        $region14: #{tpu_custom_call.1} parent=11 // pred_check_branch
          %177 = sbr.rel (%p175) target = $region16
        $region15: #{tpu_custom_call.1} parent=11 // pred_region
          %s179 = ssub.s32 1024, 1024
          %180 = vsyncadd [#allocation4], %s179
          %s181 = sshll.u32 [#allocation3], 4
          %s182 = int_to_ptr.vmem [resolvable:$true] %s181
          %187 = dma.hbm_to_vmem [thread:$0]  %s0, 1024, %s182, [#allocation4], 512, 512, 32
        $region16: #{tpu_custom_call.1} parent=11 // pred_fallthru
          _
        // Predicated region
        $region17: #{tpu_custom_call.1} parent=11 // pred_check
          %p188 = pneg %p139
        $region18: #{tpu_custom_call.1} parent=11 // pred_check_branch
          %190 = sbr.rel (%p188) target = $region20
        $region19: #{tpu_custom_call.1} parent=11 // pred_region
          %s192 = ssub.s32 64, 64
          %193 = vsyncadd [#allocation10], %s192
          %s195 = sshll.u32 [#allocation11], 4
          %s196 = int_to_ptr.vmem [resolvable:$true] %s195
          %198 = dma.hbm_to_vmem [thread:$0]  %s4, 64, %s196, [#allocation10]
        $region20: #{tpu_custom_call.1} parent=11 // pred_fallthru
          _
      $region12: #{tpu_custom_call.1} parent=5 // pred_fallthru
        _
      %p199 = scmp.lt.s32.totalorder %s19, 4
      // Predicated region
      $region21: #{tpu_custom_call.1} parent=5 // pred_check
        %p200 = pneg %p199
      $region22: #{tpu_custom_call.1} parent=5 // pred_check_branch
        %202 = sbr.rel (%p200) target = $region24
      $region23: #{tpu_custom_call.1} parent=5 // pred_region
        // Predicated region
        $region25: #{tpu_custom_call.1} parent=23 // pred_check
          %p203 = pneg %p60
        $region26: #{tpu_custom_call.1} parent=23 // pred_check_branch
          %205 = sbr.rel (%p203) target = $region28
        $region27: #{tpu_custom_call.1} parent=23 // pred_region
          %s206 = sand.u32 %s19, 1
          %s207 = scalar_lea.sflag [#allocation7], %s206
          %s208 = sand.u32 %s50, 1
          %s209 = smul.addr %s208, 1024
          %s210 = scalar_lea.vmem [#allocation6], %s209
          %s211 = smul.u32 4, %s19
          %s213 = ssub.s32 16384, 16384
          %214 = vsyncadd %s207, %s213
          %s215 = smul.addr %s211, 64
          %s216 = scalar_lea.hbm %s1, %s215
          %s217 = sshll.u32 %s210, 4
          %s218 = int_to_ptr.vmem [resolvable:$true] %s217
          %223 = dma.hbm_to_vmem [thread:$0]  %s216, 16384, %s218, %s207, 1024, 256, 16
        $region28: #{tpu_custom_call.1} parent=23 // pred_fallthru
          _
        // Predicated region
        $region29: #{tpu_custom_call.1} parent=23 // pred_check
          %p224 = pneg %p86
        $region30: #{tpu_custom_call.1} parent=23 // pred_check_branch
          %226 = sbr.rel (%p224) target = $region32
        $region31: #{tpu_custom_call.1} parent=23 // pred_region
          %s227 = sand.u32 %s19, 1
          %s228 = scalar_lea.sflag [#allocation7], %s227
          %s229 = sand.u32 %s76, 1
          %s230 = smul.addr %s229, 4
          %s231 = scalar_lea.vmem [#allocation8], %s230
          %s232 = smul.u32 4, %s19
          %s234 = ssub.s32 64, 64
          %235 = vsyncadd %s228, %s234
          %s236 = smul.addr %s232, 16
          %s237 = scalar_lea.hbm %s2, %s236
          %s239 = sshll.u32 %s231, 4
          %s240 = int_to_ptr.vmem [resolvable:$true] %s239
          %242 = dma.hbm_to_vmem [thread:$0]  %s237, 64, %s240, %s228
        $region32: #{tpu_custom_call.1} parent=23 // pred_fallthru
          _
        // Predicated region
        $region33: #{tpu_custom_call.1} parent=23 // pred_check
          %p243 = pneg %p112
        $region34: #{tpu_custom_call.1} parent=23 // pred_check_branch
          %245 = sbr.rel (%p243) target = $region36
        $region35: #{tpu_custom_call.1} parent=23 // pred_region
          %s246 = sand.u32 %s19, 1
          %s247 = scalar_lea.sflag [#allocation10], %s246
          %s248 = sand.u32 %s102, 1
          %s249 = smul.addr %s248, 1024
          %s250 = scalar_lea.vmem [#allocation9], %s249
          %s251 = smul.u32 64, %s19
          %s253 = ssub.s32 16384, 16384
          %254 = vsyncadd %s247, %s253
          %s255 = smul.addr %s251, 4
          %s256 = smul.addr %s255, 64
          %s257 = scalar_lea.hbm %s3, %s256
          %s258 = sshll.u32 %s250, 4
          %s259 = int_to_ptr.vmem [resolvable:$true] %s258
          %264 = dma.hbm_to_vmem [thread:$0]  %s257, 16384, %s259, %s247, 256, 256, 16
        $region36: #{tpu_custom_call.1} parent=23 // pred_fallthru
          _
      $region24: #{tpu_custom_call.1} parent=5 // pred_fallthru
        _
      %p265 = scmp.le.s32.totalorder 1, %s19
      %p266 = scmp.lt.s32.totalorder %s19, 5
      %p267 = pnand %p265, %p266
      %p268 = pneg %p267
      // Predicated region
      $region37: #{tpu_custom_call.1} parent=5 // pred_check
        _
      $region38: #{tpu_custom_call.1} parent=5 // pred_check_branch
        %270 = sbr.rel (%p267) target = $region40
      $region39: #{tpu_custom_call.1} parent=5 // pred_region
        %s271 = ssub.s32 %s19, 1
        // Predicated region
        $region41: #{tpu_custom_call.1} parent=39 // pred_check
          %p272 = pneg %p40
        $region42: #{tpu_custom_call.1} parent=39 // pred_check_branch
          %274 = sbr.rel (%p272) target = $region44
        $region43: #{tpu_custom_call.1} parent=39 // pred_region
          %275 = dma.done [#allocation4], 1024
        $region44: #{tpu_custom_call.1} parent=39 // pred_fallthru
          _
        %s276 = sand.u32 %s24, 1
        %s277 = scalar_lea.sflag [#allocation7], %s276
        %s278 = sand.u32 %s53, 1
        %s279 = smul.addr %s278, 1024
        %s280 = scalar_lea.vmem [#allocation6], %s279
        // Predicated region
        $region45: #{tpu_custom_call.1} parent=39 // pred_check
          %p281 = pneg %p66
        $region46: #{tpu_custom_call.1} parent=39 // pred_check_branch
          %283 = sbr.rel (%p281) target = $region48
        $region47: #{tpu_custom_call.1} parent=39 // pred_region
          %284 = dma.done %s277, 16384
        $region48: #{tpu_custom_call.1} parent=39 // pred_fallthru
          _
        %s285 = sand.u32 %s24, 1
        %s286 = scalar_lea.sflag [#allocation7], %s285
        %s287 = sand.u32 %s79, 1
        %s288 = smul.addr %s287, 4
        %s289 = scalar_lea.vmem [#allocation8], %s288
        // Predicated region
        $region49: #{tpu_custom_call.1} parent=39 // pred_check
          %p290 = pneg %p92
        $region50: #{tpu_custom_call.1} parent=39 // pred_check_branch
          %292 = sbr.rel (%p290) target = $region52
        $region51: #{tpu_custom_call.1} parent=39 // pred_region
          %293 = dma.done %s286, 64
        $region52: #{tpu_custom_call.1} parent=39 // pred_fallthru
          _
        %s294 = sand.u32 %s24, 1
        %s295 = scalar_lea.sflag [#allocation10], %s294
        %s296 = sand.u32 %s105, 1
        %s297 = smul.addr %s296, 1024
        %s298 = scalar_lea.vmem [#allocation9], %s297
        // Predicated region
        $region53: #{tpu_custom_call.1} parent=39 // pred_check
          %p299 = pneg %p118
        $region54: #{tpu_custom_call.1} parent=39 // pred_check_branch
          %301 = sbr.rel (%p299) target = $region56
        $region55: #{tpu_custom_call.1} parent=39 // pred_region
          %302 = dma.done %s295, 16384
        $region56: #{tpu_custom_call.1} parent=39 // pred_fallthru
          _
        // Predicated region
        $region57: #{tpu_custom_call.1} parent=39 // pred_check
          %p303 = pneg %p139
        $region58: #{tpu_custom_call.1} parent=39 // pred_check_branch
          %305 = sbr.rel (%p303) target = $region60
        $region59: #{tpu_custom_call.1} parent=39 // pred_region
          %306 = dma.done [#allocation10], 64
        $region60: #{tpu_custom_call.1} parent=39 // pred_fallthru
          _
        %p307 = pneg %p40
        %p308 = pneg %p37
        %s309 = sand.u32 %s24, 1
        %s310 = scalar_lea.sflag [#allocation7], %s309
        %s311 = sand.u32 %s53, 1
        %s312 = smul.addr %s311, 1024
        %s313 = scalar_lea.vmem [#allocation6], %s312
        %p314 = pneg %p66
        %p315 = pneg %p63
        %s316 = sand.u32 %s24, 1
        %s317 = scalar_lea.sflag [#allocation7], %s316
        %s318 = sand.u32 %s79, 1
        %s319 = smul.addr %s318, 4
        %s320 = scalar_lea.vmem [#allocation8], %s319
        %p321 = pneg %p92
        %p322 = pneg %p89
        %s323 = sand.u32 %s24, 1
        %s324 = scalar_lea.sflag [#allocation10], %s323
        %s325 = sand.u32 %s105, 1
        %s326 = smul.addr %s325, 1024
        %s327 = scalar_lea.vmem [#allocation9], %s326
        %p328 = pneg %p118
        %p329 = pneg %p115
        %p330 = pneg %p139
        %p331 = pneg %p136
        %p332 = pneg %p160
        %p333 = pneg %p157
        %s334 = smul.u32 4, %s24
        %s335 = smul.u32 4, %s24
        %s336 = smul.u32 64, %s24
        %p337 = scmp.eq.s32.totalorder %s24, 0
        // Predicated region
        $region61: #{tpu_custom_call.1} parent=39 // pred_check
          %p338 = pneg %p337
        $region62: #{tpu_custom_call.1} parent=39 // pred_check_branch
          %340 = sbr.rel (%p338) target = $region64
        $region63: #{tpu_custom_call.1} parent=39 // pred_region
          %341 = vst [vmem:[#allocation2] sm:$0xff] 0.0
          %342 = vst [vmem:[#allocation2 + $0x8] sm:$0xff] 0.0
          %343 = vst [vmem:[#allocation2 + $0x10] sm:$0xff] 0.0
          %344 = vst [vmem:[#allocation2 + $0x18] sm:$0xff] 0.0
          %345 = vst [vmem:[#allocation2 + $0x20] sm:$0xff] 0.0
          %346 = vst [vmem:[#allocation2 + $0x28] sm:$0xff] 0.0
          %347 = vst [vmem:[#allocation2 + $0x30] sm:$0xff] 0.0
          %348 = vst [vmem:[#allocation2 + $0x38] sm:$0xff] 0.0
        $region64: #{tpu_custom_call.1} parent=39 // pred_fallthru
          _
        %v349 = vld [vmem:[#allocation3] sm:$0xff]
        %v350 = vld [vmem:[#allocation3 + $0x8] sm:$0xff]
        %v351 = vld [vmem:[#allocation3 + $0x10] sm:$0xff]
        %v352 = vld [vmem:[#allocation3 + $0x18] sm:$0xff]
        %v353 = vld [vmem:[#allocation3 + $0x20] sm:$0xff]
        %v354 = vld [vmem:[#allocation3 + $0x28] sm:$0xff]
        %v355 = vld [vmem:[#allocation3 + $0x30] sm:$0xff]
        %v356 = vld [vmem:[#allocation3 + $0x38] sm:$0xff]
        %v357 = vpack.c.bf16 %v353, %v349
        %v358 = vpack.c.bf16 %v354, %v350
        %v359 = vpack.c.bf16 %v355, %v351
        %v360 = vpack.c.bf16 %v356, %v352
        %v361 = vld [vmem:[%s280] sm:$0xff]
        %v362 = vld [vmem:[%s280 + $0x8] sm:$0xff]
        %v363 = vld [vmem:[%s280 + $0x10] sm:$0xff]
        %v364 = vld [vmem:[%s280 + $0x18] sm:$0xff]
        %v365 = vld [vmem:[%s280 + $0x20] sm:$0xff]
        %v366 = vld [vmem:[%s280 + $0x28] sm:$0xff]
        %v367 = vld [vmem:[%s280 + $0x30] sm:$0xff]
        %v368 = vld [vmem:[%s280 + $0x38] sm:$0xff]
        %v369 = vld [vmem:[%s280 + $0x40] sm:$0xff]
        %v370 = vld [vmem:[%s280 + $0x48] sm:$0xff]
        %v371 = vld [vmem:[%s280 + $0x50] sm:$0xff]
        %v372 = vld [vmem:[%s280 + $0x58] sm:$0xff]
        %v373 = vld [vmem:[%s280 + $0x60] sm:$0xff]
        %v374 = vld [vmem:[%s280 + $0x68] sm:$0xff]
        %v375 = vld [vmem:[%s280 + $0x70] sm:$0xff]
        %v376 = vld [vmem:[%s280 + $0x78] sm:$0xff]
        %v377 = vld [vmem:[%s280 + $0x80] sm:$0xff]
        %v378 = vld [vmem:[%s280 + $0x88] sm:$0xff]
        %v379 = vld [vmem:[%s280 + $0x90] sm:$0xff]
        %v380 = vld [vmem:[%s280 + $0x98] sm:$0xff]
        %v381 = vld [vmem:[%s280 + $0xa0] sm:$0xff]
        %v382 = vld [vmem:[%s280 + $0xa8] sm:$0xff]
        %v383 = vld [vmem:[%s280 + $0xb0] sm:$0xff]
        %v384 = vld [vmem:[%s280 + $0xb8] sm:$0xff]
        %v385 = vld [vmem:[%s280 + $0xc0] sm:$0xff]
        %v386 = vld [vmem:[%s280 + $0xc8] sm:$0xff]
        %v387 = vld [vmem:[%s280 + $0xd0] sm:$0xff]
        %v388 = vld [vmem:[%s280 + $0xd8] sm:$0xff]
        %v389 = vld [vmem:[%s280 + $0xe0] sm:$0xff]
        %v390 = vld [vmem:[%s280 + $0xe8] sm:$0xff]
        %v391 = vld [vmem:[%s280 + $0xf0] sm:$0xff]
        %v392 = vld [vmem:[%s280 + $0xf8] sm:$0xff]
        %v393 = vld [vmem:[%s280 + $0x100] sm:$0xff]
        %v394 = vld [vmem:[%s280 + $0x108] sm:$0xff]
        %v395 = vld [vmem:[%s280 + $0x110] sm:$0xff]
        %v396 = vld [vmem:[%s280 + $0x118] sm:$0xff]
        %v397 = vld [vmem:[%s280 + $0x120] sm:$0xff]
        %v398 = vld [vmem:[%s280 + $0x128] sm:$0xff]
        %v399 = vld [vmem:[%s280 + $0x130] sm:$0xff]
        %v400 = vld [vmem:[%s280 + $0x138] sm:$0xff]
        %v401 = vld [vmem:[%s280 + $0x140] sm:$0xff]
        %v402 = vld [vmem:[%s280 + $0x148] sm:$0xff]
        %v403 = vld [vmem:[%s280 + $0x150] sm:$0xff]
        %v404 = vld [vmem:[%s280 + $0x158] sm:$0xff]
        %v405 = vld [vmem:[%s280 + $0x160] sm:$0xff]
        %v406 = vld [vmem:[%s280 + $0x168] sm:$0xff]
        %v407 = vld [vmem:[%s280 + $0x170] sm:$0xff]
        %v408 = vld [vmem:[%s280 + $0x178] sm:$0xff]
        %v409 = vld [vmem:[%s280 + $0x180] sm:$0xff]
        %v410 = vld [vmem:[%s280 + $0x188] sm:$0xff]
        %v411 = vld [vmem:[%s280 + $0x190] sm:$0xff]
        %v412 = vld [vmem:[%s280 + $0x198] sm:$0xff]
        %v413 = vld [vmem:[%s280 + $0x1a0] sm:$0xff]
        %v414 = vld [vmem:[%s280 + $0x1a8] sm:$0xff]
        %v415 = vld [vmem:[%s280 + $0x1b0] sm:$0xff]
        %v416 = vld [vmem:[%s280 + $0x1b8] sm:$0xff]
        %v417 = vld [vmem:[%s280 + $0x1c0] sm:$0xff]
        %v418 = vld [vmem:[%s280 + $0x1c8] sm:$0xff]
        %v419 = vld [vmem:[%s280 + $0x1d0] sm:$0xff]
        %v420 = vld [vmem:[%s280 + $0x1d8] sm:$0xff]
        %v421 = vld [vmem:[%s280 + $0x1e0] sm:$0xff]
        %v422 = vld [vmem:[%s280 + $0x1e8] sm:$0xff]
        %v423 = vld [vmem:[%s280 + $0x1f0] sm:$0xff]
        %v424 = vld [vmem:[%s280 + $0x1f8] sm:$0xff]
        %v425 = vld [vmem:[%s280 + $0x200] sm:$0xff]
        %v426 = vld [vmem:[%s280 + $0x208] sm:$0xff]
        %v427 = vld [vmem:[%s280 + $0x210] sm:$0xff]
        %v428 = vld [vmem:[%s280 + $0x218] sm:$0xff]
        %v429 = vld [vmem:[%s280 + $0x220] sm:$0xff]
        %v430 = vld [vmem:[%s280 + $0x228] sm:$0xff]
        %v431 = vld [vmem:[%s280 + $0x230] sm:$0xff]
        %v432 = vld [vmem:[%s280 + $0x238] sm:$0xff]
        %v433 = vld [vmem:[%s280 + $0x240] sm:$0xff]
        %v434 = vld [vmem:[%s280 + $0x248] sm:$0xff]
        %v435 = vld [vmem:[%s280 + $0x250] sm:$0xff]
        %v436 = vld [vmem:[%s280 + $0x258] sm:$0xff]
        %v437 = vld [vmem:[%s280 + $0x260] sm:$0xff]
        %v438 = vld [vmem:[%s280 + $0x268] sm:$0xff]
        %v439 = vld [vmem:[%s280 + $0x270] sm:$0xff]
        %v440 = vld [vmem:[%s280 + $0x278] sm:$0xff]
        %v441 = vld [vmem:[%s280 + $0x280] sm:$0xff]
        %v442 = vld [vmem:[%s280 + $0x288] sm:$0xff]
        %v443 = vld [vmem:[%s280 + $0x290] sm:$0xff]
        %v444 = vld [vmem:[%s280 + $0x298] sm:$0xff]
        %v445 = vld [vmem:[%s280 + $0x2a0] sm:$0xff]
        %v446 = vld [vmem:[%s280 + $0x2a8] sm:$0xff]
        %v447 = vld [vmem:[%s280 + $0x2b0] sm:$0xff]
        %v448 = vld [vmem:[%s280 + $0x2b8] sm:$0xff]
        %v449 = vld [vmem:[%s280 + $0x2c0] sm:$0xff]
        %v450 = vld [vmem:[%s280 + $0x2c8] sm:$0xff]
        %v451 = vld [vmem:[%s280 + $0x2d0] sm:$0xff]
        %v452 = vld [vmem:[%s280 + $0x2d8] sm:$0xff]
        %v453 = vld [vmem:[%s280 + $0x2e0] sm:$0xff]
        %v454 = vld [vmem:[%s280 + $0x2e8] sm:$0xff]
        %v455 = vld [vmem:[%s280 + $0x2f0] sm:$0xff]
        %v456 = vld [vmem:[%s280 + $0x2f8] sm:$0xff]
        %v457 = vld [vmem:[%s280 + $0x300] sm:$0xff]
        %v458 = vld [vmem:[%s280 + $0x308] sm:$0xff]
        %v459 = vld [vmem:[%s280 + $0x310] sm:$0xff]
        %v460 = vld [vmem:[%s280 + $0x318] sm:$0xff]
        %v461 = vld [vmem:[%s280 + $0x320] sm:$0xff]
        %v462 = vld [vmem:[%s280 + $0x328] sm:$0xff]
        %v463 = vld [vmem:[%s280 + $0x330] sm:$0xff]
        %v464 = vld [vmem:[%s280 + $0x338] sm:$0xff]
        %v465 = vld [vmem:[%s280 + $0x340] sm:$0xff]
        %v466 = vld [vmem:[%s280 + $0x348] sm:$0xff]
        %v467 = vld [vmem:[%s280 + $0x350] sm:$0xff]
        %v468 = vld [vmem:[%s280 + $0x358] sm:$0xff]
        %v469 = vld [vmem:[%s280 + $0x360] sm:$0xff]
        %v470 = vld [vmem:[%s280 + $0x368] sm:$0xff]
        %v471 = vld [vmem:[%s280 + $0x370] sm:$0xff]
        %v472 = vld [vmem:[%s280 + $0x378] sm:$0xff]
        %v473 = vld [vmem:[%s280 + $0x380] sm:$0xff]
        %v474 = vld [vmem:[%s280 + $0x388] sm:$0xff]
        %v475 = vld [vmem:[%s280 + $0x390] sm:$0xff]
        %v476 = vld [vmem:[%s280 + $0x398] sm:$0xff]
        %v477 = vld [vmem:[%s280 + $0x3a0] sm:$0xff]
        %v478 = vld [vmem:[%s280 + $0x3a8] sm:$0xff]
        %v479 = vld [vmem:[%s280 + $0x3b0] sm:$0xff]
        %v480 = vld [vmem:[%s280 + $0x3b8] sm:$0xff]
        %v481 = vld [vmem:[%s280 + $0x3c0] sm:$0xff]
        %v482 = vld [vmem:[%s280 + $0x3c8] sm:$0xff]
        %v483 = vld [vmem:[%s280 + $0x3d0] sm:$0xff]
        %v484 = vld [vmem:[%s280 + $0x3d8] sm:$0xff]
        %v485 = vld [vmem:[%s280 + $0x3e0] sm:$0xff]
        %v486 = vld [vmem:[%s280 + $0x3e8] sm:$0xff]
        %v487 = vld [vmem:[%s280 + $0x3f0] sm:$0xff]
        %v488 = vld [vmem:[%s280 + $0x3f8] sm:$0xff]
        %v489 = vld [vmem:[%s289] sm:$0xf]
        %v491 = vlaneseq
        %v492 = vshrl.u32 %v491, 7
        %v493 = vsub.s32 0, %v492
        %v494 = vrot.slane %v489, %v493
        %v495 = vlaneseq
        %v496 = vshrl.u32 %v495, 7
        %v497 = vsub.s32 1, %v496
        %v498 = vrot.slane %v489, %v497
        %v499 = vlaneseq
        %v500 = vshrl.u32 %v499, 7
        %v501 = vsub.s32 2, %v500
        %v502 = vrot.slane %v489, %v501
        %v503 = vlaneseq
        %v504 = vshrl.u32 %v503, 7
        %v505 = vsub.s32 3, %v504
        %v506 = vrot.slane %v489, %v505
        %v639 = vunpack.c.l.b16 %v361
        %v640 = vunpack.c.h.b16 %v361
        %v641 = vunpack.c.l.b16 %v362
        %v642 = vunpack.c.h.b16 %v362
        %v643 = vunpack.c.l.b16 %v363
        %v644 = vunpack.c.h.b16 %v363
        %v645 = vunpack.c.l.b16 %v364
        %v646 = vunpack.c.h.b16 %v364
        %v647 = vunpack.c.l.b16 %v365
        %v648 = vunpack.c.h.b16 %v365
        %v649 = vunpack.c.l.b16 %v366
        %v650 = vunpack.c.h.b16 %v366
        %v651 = vunpack.c.l.b16 %v367
        %v652 = vunpack.c.h.b16 %v367
        %v653 = vunpack.c.l.b16 %v368
        %v654 = vunpack.c.h.b16 %v368
        %v655 = vunpack.c.l.b16 %v369
        %v656 = vunpack.c.h.b16 %v369
        %v657 = vunpack.c.l.b16 %v370
        %v658 = vunpack.c.h.b16 %v370
        %v659 = vunpack.c.l.b16 %v371
        %v660 = vunpack.c.h.b16 %v371
        %v661 = vunpack.c.l.b16 %v372
        %v662 = vunpack.c.h.b16 %v372
        %v663 = vunpack.c.l.b16 %v373
        %v664 = vunpack.c.h.b16 %v373
        %v665 = vunpack.c.l.b16 %v374
        %v666 = vunpack.c.h.b16 %v374
        %v667 = vunpack.c.l.b16 %v375
        %v668 = vunpack.c.h.b16 %v375
        %v669 = vunpack.c.l.b16 %v376
        %v670 = vunpack.c.h.b16 %v376
        %v671 = vunpack.c.l.b16 %v377
        %v672 = vunpack.c.h.b16 %v377
        %v673 = vunpack.c.l.b16 %v378
        %v674 = vunpack.c.h.b16 %v378
        %v675 = vunpack.c.l.b16 %v379
        %v676 = vunpack.c.h.b16 %v379
        %v677 = vunpack.c.l.b16 %v380
        %v678 = vunpack.c.h.b16 %v380
        %v679 = vunpack.c.l.b16 %v381
        %v680 = vunpack.c.h.b16 %v381
        %v681 = vunpack.c.l.b16 %v382
        %v682 = vunpack.c.h.b16 %v382
        %v683 = vunpack.c.l.b16 %v383
        %v684 = vunpack.c.h.b16 %v383
        %v685 = vunpack.c.l.b16 %v384
        %v686 = vunpack.c.h.b16 %v384
        %v687 = vunpack.c.l.b16 %v385
        %v688 = vunpack.c.h.b16 %v385
        %v689 = vunpack.c.l.b16 %v386
        %v690 = vunpack.c.h.b16 %v386
        %v691 = vunpack.c.l.b16 %v387
        %v692 = vunpack.c.h.b16 %v387
        %v693 = vunpack.c.l.b16 %v388
        %v694 = vunpack.c.h.b16 %v388
        %v695 = vunpack.c.l.b16 %v389
        %v696 = vunpack.c.h.b16 %v389
        %v697 = vunpack.c.l.b16 %v390
        %v698 = vunpack.c.h.b16 %v390
        %v699 = vunpack.c.l.b16 %v391
        %v700 = vunpack.c.h.b16 %v391
        %v701 = vunpack.c.l.b16 %v392
        %v702 = vunpack.c.h.b16 %v392
        %v703 = vunpack.c.l.b16 %v393
        %v704 = vunpack.c.h.b16 %v393
        %v705 = vunpack.c.l.b16 %v394
        %v706 = vunpack.c.h.b16 %v394
        %v707 = vunpack.c.l.b16 %v395
        %v708 = vunpack.c.h.b16 %v395
        %v709 = vunpack.c.l.b16 %v396
        %v710 = vunpack.c.h.b16 %v396
        %v711 = vunpack.c.l.b16 %v397
        %v712 = vunpack.c.h.b16 %v397
        %v713 = vunpack.c.l.b16 %v398
        %v714 = vunpack.c.h.b16 %v398
        %v715 = vunpack.c.l.b16 %v399
        %v716 = vunpack.c.h.b16 %v399
        %v717 = vunpack.c.l.b16 %v400
        %v718 = vunpack.c.h.b16 %v400
        %v719 = vunpack.c.l.b16 %v401
        %v720 = vunpack.c.h.b16 %v401
        %v721 = vunpack.c.l.b16 %v402
        %v722 = vunpack.c.h.b16 %v402
        %v723 = vunpack.c.l.b16 %v403
        %v724 = vunpack.c.h.b16 %v403
        %v725 = vunpack.c.l.b16 %v404
        %v726 = vunpack.c.h.b16 %v404
        %v727 = vunpack.c.l.b16 %v405
        %v728 = vunpack.c.h.b16 %v405
        %v729 = vunpack.c.l.b16 %v406
        %v730 = vunpack.c.h.b16 %v406
        %v731 = vunpack.c.l.b16 %v407
        %v732 = vunpack.c.h.b16 %v407
        %v733 = vunpack.c.l.b16 %v408
        %v734 = vunpack.c.h.b16 %v408
        %v735 = vunpack.c.l.b16 %v409
        %v736 = vunpack.c.h.b16 %v409
        %v737 = vunpack.c.l.b16 %v410
        %v738 = vunpack.c.h.b16 %v410
        %v739 = vunpack.c.l.b16 %v411
        %v740 = vunpack.c.h.b16 %v411
        %v741 = vunpack.c.l.b16 %v412
        %v742 = vunpack.c.h.b16 %v412
        %v743 = vunpack.c.l.b16 %v413
        %v744 = vunpack.c.h.b16 %v413
        %v745 = vunpack.c.l.b16 %v414
        %v746 = vunpack.c.h.b16 %v414
        %v747 = vunpack.c.l.b16 %v415
        %v748 = vunpack.c.h.b16 %v415
        %v749 = vunpack.c.l.b16 %v416
        %v750 = vunpack.c.h.b16 %v416
        %v751 = vunpack.c.l.b16 %v417
        %v752 = vunpack.c.h.b16 %v417
        %v753 = vunpack.c.l.b16 %v418
        %v754 = vunpack.c.h.b16 %v418
        %v755 = vunpack.c.l.b16 %v419
        %v756 = vunpack.c.h.b16 %v419
        %v757 = vunpack.c.l.b16 %v420
        %v758 = vunpack.c.h.b16 %v420
        %v759 = vunpack.c.l.b16 %v421
        %v760 = vunpack.c.h.b16 %v421
        %v761 = vunpack.c.l.b16 %v422
        %v762 = vunpack.c.h.b16 %v422
        %v763 = vunpack.c.l.b16 %v423
        %v764 = vunpack.c.h.b16 %v423
        %v765 = vunpack.c.l.b16 %v424
        %v766 = vunpack.c.h.b16 %v424
        %v767 = vunpack.c.l.b16 %v425
        %v768 = vunpack.c.h.b16 %v425
        %v769 = vunpack.c.l.b16 %v426
        %v770 = vunpack.c.h.b16 %v426
        %v771 = vunpack.c.l.b16 %v427
        %v772 = vunpack.c.h.b16 %v427
        %v773 = vunpack.c.l.b16 %v428
        %v774 = vunpack.c.h.b16 %v428
        %v775 = vunpack.c.l.b16 %v429
        %v776 = vunpack.c.h.b16 %v429
        %v777 = vunpack.c.l.b16 %v430
        %v778 = vunpack.c.h.b16 %v430
        %v779 = vunpack.c.l.b16 %v431
        %v780 = vunpack.c.h.b16 %v431
        %v781 = vunpack.c.l.b16 %v432
        %v782 = vunpack.c.h.b16 %v432
        %v783 = vunpack.c.l.b16 %v433
        %v784 = vunpack.c.h.b16 %v433
        %v785 = vunpack.c.l.b16 %v434
        %v786 = vunpack.c.h.b16 %v434
        %v787 = vunpack.c.l.b16 %v435
        %v788 = vunpack.c.h.b16 %v435
        %v789 = vunpack.c.l.b16 %v436
        %v790 = vunpack.c.h.b16 %v436
        %v791 = vunpack.c.l.b16 %v437
        %v792 = vunpack.c.h.b16 %v437
        %v793 = vunpack.c.l.b16 %v438
        %v794 = vunpack.c.h.b16 %v438
        %v795 = vunpack.c.l.b16 %v439
        %v796 = vunpack.c.h.b16 %v439
        %v797 = vunpack.c.l.b16 %v440
        %v798 = vunpack.c.h.b16 %v440
        %v799 = vunpack.c.l.b16 %v441
        %v800 = vunpack.c.h.b16 %v441
        %v801 = vunpack.c.l.b16 %v442
        %v802 = vunpack.c.h.b16 %v442
        %v803 = vunpack.c.l.b16 %v443
        %v804 = vunpack.c.h.b16 %v443
        %v805 = vunpack.c.l.b16 %v444
        %v806 = vunpack.c.h.b16 %v444
        %v807 = vunpack.c.l.b16 %v445
        %v808 = vunpack.c.h.b16 %v445
        %v809 = vunpack.c.l.b16 %v446
        %v810 = vunpack.c.h.b16 %v446
        %v811 = vunpack.c.l.b16 %v447
        %v812 = vunpack.c.h.b16 %v447
        %v813 = vunpack.c.l.b16 %v448
        %v814 = vunpack.c.h.b16 %v448
        %v815 = vunpack.c.l.b16 %v449
        %v816 = vunpack.c.h.b16 %v449
        %v817 = vunpack.c.l.b16 %v450
        %v818 = vunpack.c.h.b16 %v450
        %v819 = vunpack.c.l.b16 %v451
        %v820 = vunpack.c.h.b16 %v451
        %v821 = vunpack.c.l.b16 %v452
        %v822 = vunpack.c.h.b16 %v452
        %v823 = vunpack.c.l.b16 %v453
        %v824 = vunpack.c.h.b16 %v453
        %v825 = vunpack.c.l.b16 %v454
        %v826 = vunpack.c.h.b16 %v454
        %v827 = vunpack.c.l.b16 %v455
        %v828 = vunpack.c.h.b16 %v455
        %v829 = vunpack.c.l.b16 %v456
        %v830 = vunpack.c.h.b16 %v456
        %v831 = vunpack.c.l.b16 %v457
        %v832 = vunpack.c.h.b16 %v457
        %v833 = vunpack.c.l.b16 %v458
        %v834 = vunpack.c.h.b16 %v458
        %v835 = vunpack.c.l.b16 %v459
        %v836 = vunpack.c.h.b16 %v459
        %v837 = vunpack.c.l.b16 %v460
        %v838 = vunpack.c.h.b16 %v460
        %v839 = vunpack.c.l.b16 %v461
        %v840 = vunpack.c.h.b16 %v461
        %v841 = vunpack.c.l.b16 %v462
        %v842 = vunpack.c.h.b16 %v462
        %v843 = vunpack.c.l.b16 %v463
        %v844 = vunpack.c.h.b16 %v463
        %v845 = vunpack.c.l.b16 %v464
        %v846 = vunpack.c.h.b16 %v464
        %v847 = vunpack.c.l.b16 %v465
        %v848 = vunpack.c.h.b16 %v465
        %v849 = vunpack.c.l.b16 %v466
        %v850 = vunpack.c.h.b16 %v466
        %v851 = vunpack.c.l.b16 %v467
        %v852 = vunpack.c.h.b16 %v467
        %v853 = vunpack.c.l.b16 %v468
        %v854 = vunpack.c.h.b16 %v468
        %v855 = vunpack.c.l.b16 %v469
        %v856 = vunpack.c.h.b16 %v469
        %v857 = vunpack.c.l.b16 %v470
        %v858 = vunpack.c.h.b16 %v470
        %v859 = vunpack.c.l.b16 %v471
        %v860 = vunpack.c.h.b16 %v471
        %v861 = vunpack.c.l.b16 %v472
        %v862 = vunpack.c.h.b16 %v472
        %v863 = vunpack.c.l.b16 %v473
        %v864 = vunpack.c.h.b16 %v473
        %v865 = vunpack.c.l.b16 %v474
        %v866 = vunpack.c.h.b16 %v474
        %v867 = vunpack.c.l.b16 %v475
        %v868 = vunpack.c.h.b16 %v475
        %v869 = vunpack.c.l.b16 %v476
        %v870 = vunpack.c.h.b16 %v476
        %v871 = vunpack.c.l.b16 %v477
        %v872 = vunpack.c.h.b16 %v477
        %v873 = vunpack.c.l.b16 %v478
        %v874 = vunpack.c.h.b16 %v478
        %v875 = vunpack.c.l.b16 %v479
        %v876 = vunpack.c.h.b16 %v479
        %v877 = vunpack.c.l.b16 %v480
        %v878 = vunpack.c.h.b16 %v480
        %v879 = vunpack.c.l.b16 %v481
        %v880 = vunpack.c.h.b16 %v481
        %v881 = vunpack.c.l.b16 %v482
        %v882 = vunpack.c.h.b16 %v482
        %v883 = vunpack.c.l.b16 %v483
        %v884 = vunpack.c.h.b16 %v483
        %v885 = vunpack.c.l.b16 %v484
        %v886 = vunpack.c.h.b16 %v484
        %v887 = vunpack.c.l.b16 %v485
        %v888 = vunpack.c.h.b16 %v485
        %v889 = vunpack.c.l.b16 %v486
        %v890 = vunpack.c.h.b16 %v486
        %v891 = vunpack.c.l.b16 %v487
        %v892 = vunpack.c.h.b16 %v487
        %v893 = vunpack.c.l.b16 %v488
        %v894 = vunpack.c.h.b16 %v488
        %v895 = vpack.c.b16 %v643, %v639
        %v896 = vpack.c.b16 %v644, %v640
        %v897 = vpack.c.b16 %v645, %v641
        %v898 = vpack.c.b16 %v646, %v642
        %v899 = vpack.c.b16 %v651, %v647
        %v900 = vpack.c.b16 %v652, %v648
        %v901 = vpack.c.b16 %v653, %v649
        %v902 = vpack.c.b16 %v654, %v650
        %v903 = vpack.c.b16 %v659, %v655
        %v904 = vpack.c.b16 %v660, %v656
        %v905 = vpack.c.b16 %v661, %v657
        %v906 = vpack.c.b16 %v662, %v658
        %v907 = vpack.c.b16 %v667, %v663
        %v908 = vpack.c.b16 %v668, %v664
        %v909 = vpack.c.b16 %v669, %v665
        %v910 = vpack.c.b16 %v670, %v666
        %v911 = vpack.c.b16 %v675, %v671
        %v912 = vpack.c.b16 %v676, %v672
        %v913 = vpack.c.b16 %v677, %v673
        %v914 = vpack.c.b16 %v678, %v674
        %v915 = vpack.c.b16 %v683, %v679
        %v916 = vpack.c.b16 %v684, %v680
        %v917 = vpack.c.b16 %v685, %v681
        %v918 = vpack.c.b16 %v686, %v682
        %v919 = vpack.c.b16 %v691, %v687
        %v920 = vpack.c.b16 %v692, %v688
        %v921 = vpack.c.b16 %v693, %v689
        %v922 = vpack.c.b16 %v694, %v690
        %v923 = vpack.c.b16 %v699, %v695
        %v924 = vpack.c.b16 %v700, %v696
        %v925 = vpack.c.b16 %v701, %v697
        %v926 = vpack.c.b16 %v702, %v698
        %v927 = vpack.c.b16 %v707, %v703
        %v928 = vpack.c.b16 %v708, %v704
        %v929 = vpack.c.b16 %v709, %v705
        %v930 = vpack.c.b16 %v710, %v706
        %v931 = vpack.c.b16 %v715, %v711
        %v932 = vpack.c.b16 %v716, %v712
        %v933 = vpack.c.b16 %v717, %v713
        %v934 = vpack.c.b16 %v718, %v714
        %v935 = vpack.c.b16 %v723, %v719
        %v936 = vpack.c.b16 %v724, %v720
        %v937 = vpack.c.b16 %v725, %v721
        %v938 = vpack.c.b16 %v726, %v722
        %v939 = vpack.c.b16 %v731, %v727
        %v940 = vpack.c.b16 %v732, %v728
        %v941 = vpack.c.b16 %v733, %v729
        %v942 = vpack.c.b16 %v734, %v730
        %v943 = vpack.c.b16 %v739, %v735
        %v944 = vpack.c.b16 %v740, %v736
        %v945 = vpack.c.b16 %v741, %v737
        %v946 = vpack.c.b16 %v742, %v738
        %v947 = vpack.c.b16 %v747, %v743
        %v948 = vpack.c.b16 %v748, %v744
        %v949 = vpack.c.b16 %v749, %v745
        %v950 = vpack.c.b16 %v750, %v746
        %v951 = vpack.c.b16 %v755, %v751
        %v952 = vpack.c.b16 %v756, %v752
        %v953 = vpack.c.b16 %v757, %v753
        %v954 = vpack.c.b16 %v758, %v754
        %v955 = vpack.c.b16 %v763, %v759
        %v956 = vpack.c.b16 %v764, %v760
        %v957 = vpack.c.b16 %v765, %v761
        %v958 = vpack.c.b16 %v766, %v762
        %v959 = vpack.c.b16 %v771, %v767
        %v960 = vpack.c.b16 %v772, %v768
        %v961 = vpack.c.b16 %v773, %v769
        %v962 = vpack.c.b16 %v774, %v770
        %v963 = vpack.c.b16 %v779, %v775
        %v964 = vpack.c.b16 %v780, %v776
        %v965 = vpack.c.b16 %v781, %v777
        %v966 = vpack.c.b16 %v782, %v778
        %v967 = vpack.c.b16 %v787, %v783
        %v968 = vpack.c.b16 %v788, %v784
        %v969 = vpack.c.b16 %v789, %v785
        %v970 = vpack.c.b16 %v790, %v786
        %v971 = vpack.c.b16 %v795, %v791
        %v972 = vpack.c.b16 %v796, %v792
        %v973 = vpack.c.b16 %v797, %v793
        %v974 = vpack.c.b16 %v798, %v794
        %v975 = vpack.c.b16 %v803, %v799
        %v976 = vpack.c.b16 %v804, %v800
        %v977 = vpack.c.b16 %v805, %v801
        %v978 = vpack.c.b16 %v806, %v802
        %v979 = vpack.c.b16 %v811, %v807
        %v980 = vpack.c.b16 %v812, %v808
        %v981 = vpack.c.b16 %v813, %v809
        %v982 = vpack.c.b16 %v814, %v810
        %v983 = vpack.c.b16 %v819, %v815
        %v984 = vpack.c.b16 %v820, %v816
        %v985 = vpack.c.b16 %v821, %v817
        %v986 = vpack.c.b16 %v822, %v818
        %v987 = vpack.c.b16 %v827, %v823
        %v988 = vpack.c.b16 %v828, %v824
        %v989 = vpack.c.b16 %v829, %v825
        %v990 = vpack.c.b16 %v830, %v826
        %v991 = vpack.c.b16 %v835, %v831
        %v992 = vpack.c.b16 %v836, %v832
        %v993 = vpack.c.b16 %v837, %v833
        %v994 = vpack.c.b16 %v838, %v834
        %v995 = vpack.c.b16 %v843, %v839
        %v996 = vpack.c.b16 %v844, %v840
        %v997 = vpack.c.b16 %v845, %v841
        %v998 = vpack.c.b16 %v846, %v842
        %v999 = vpack.c.b16 %v851, %v847
        %v1000 = vpack.c.b16 %v852, %v848
        %v1001 = vpack.c.b16 %v853, %v849
        %v1002 = vpack.c.b16 %v854, %v850
        %v1003 = vpack.c.b16 %v859, %v855
        %v1004 = vpack.c.b16 %v860, %v856
        %v1005 = vpack.c.b16 %v861, %v857
        %v1006 = vpack.c.b16 %v862, %v858
        %v1007 = vpack.c.b16 %v867, %v863
        %v1008 = vpack.c.b16 %v868, %v864
        %v1009 = vpack.c.b16 %v869, %v865
        %v1010 = vpack.c.b16 %v870, %v866
        %v1011 = vpack.c.b16 %v875, %v871
        %v1012 = vpack.c.b16 %v876, %v872
        %v1013 = vpack.c.b16 %v877, %v873
        %v1014 = vpack.c.b16 %v878, %v874
        %v1015 = vpack.c.b16 %v883, %v879
        %v1016 = vpack.c.b16 %v884, %v880
        %v1017 = vpack.c.b16 %v885, %v881
        %v1018 = vpack.c.b16 %v886, %v882
        %v1019 = vpack.c.b16 %v891, %v887
        %v1020 = vpack.c.b16 %v892, %v888
        %v1021 = vpack.c.b16 %v893, %v889
        %v1022 = vpack.c.b16 %v894, %v890
        %1151 = vmatprep.subr.bf16.mxu0 %v924
        %1152 = vmatpush1.bf16.msra.mxu0 %v923
        %1153 = vmatprep.subr.bf16.mxu0 %v920
        %1154 = vmatpush1.bf16.msra.mxu0 %v919
        %1155 = vmatprep.subr.bf16.mxu0 %v916
        %1156 = vmatpush1.bf16.msra.mxu0 %v915
        %1157 = vmatprep.subr.bf16.mxu0 %v912
        %1158 = vmatpush1.bf16.msra.mxu0 %v911
        %1159 = vmatprep.subr.bf16.mxu0 %v908
        %1160 = vmatpush1.bf16.msra.mxu0 %v907
        %1161 = vmatprep.subr.bf16.mxu0 %v904
        %1162 = vmatpush1.bf16.msra.mxu0 %v903
        %1163 = vmatprep.subr.bf16.mxu0 %v900
        %1164 = vmatpush1.bf16.msra.mxu0 %v899
        %1165 = vmatprep.subr.bf16.mxu0 %v896
        %1166 = vmatpush1.bf16.msra.mxu0 %v895
        %1167 = vmatprep.subr.bf16.mxu0 %v956
        %1168 = vmatpush2.bf16.msra.mxu0 %v955
        %1169 = vmatprep.subr.bf16.mxu0 %v952
        %1170 = vmatpush2.bf16.msra.mxu0 %v951
        %1171 = vmatprep.subr.bf16.mxu0 %v948
        %1172 = vmatpush2.bf16.msra.mxu0 %v947
        %1173 = vmatprep.subr.bf16.mxu0 %v944
        %1174 = vmatpush2.bf16.msra.mxu0 %v943
        %1175 = vmatprep.subr.bf16.mxu0 %v940
        %1176 = vmatpush2.bf16.msra.mxu0 %v939
        %1177 = vmatprep.subr.bf16.mxu0 %v936
        %1178 = vmatpush2.bf16.msra.mxu0 %v935
        %1179 = vmatprep.subr.bf16.mxu0 %v932
        %1180 = vmatpush2.bf16.msra.mxu0 %v931
        %1181 = vmatprep.subr.bf16.mxu0 %v928
        %1182 = vmatpush2.bf16.msra.mxu0 %v927
        %1183 = vmatprep.mubr.bf16.mxu0 %v358
        %1184 = vmatmul.mubr.bf16.gmra.mxu0 %v357
        %v1185 = vpop.f32.mrf.mxu0
        %v1186 = vadd.f32 %v494, %v1185
        %v1187 = vpop.f32.mrf.mxu0
        %v1188 = vadd.f32 %v498, %v1187
        %v1189 = vpop.f32.mrf.mxu0
        %v1190 = vadd.f32 %v494, %v1189
        %v1191 = vpop.f32.mrf.mxu0
        %v1192 = vadd.f32 %v498, %v1191
        %1193 = vdwg.mxu0
        %1194 = vmatprep.subr.bf16.mxu0 %v988
        %1195 = vmatpush1.bf16.msra.mxu0 %v987
        %1196 = vmatprep.subr.bf16.mxu0 %v984
        %1197 = vmatpush1.bf16.msra.mxu0 %v983
        %1198 = vmatprep.subr.bf16.mxu0 %v980
        %1199 = vmatpush1.bf16.msra.mxu0 %v979
        %1200 = vmatprep.subr.bf16.mxu0 %v976
        %1201 = vmatpush1.bf16.msra.mxu0 %v975
        %1202 = vmatprep.subr.bf16.mxu0 %v972
        %1203 = vmatpush1.bf16.msra.mxu0 %v971
        %1204 = vmatprep.subr.bf16.mxu0 %v968
        %1205 = vmatpush1.bf16.msra.mxu0 %v967
        %1206 = vmatprep.subr.bf16.mxu0 %v964
        %1207 = vmatpush1.bf16.msra.mxu0 %v963
        %1208 = vmatprep.subr.bf16.mxu0 %v960
        %1209 = vmatpush1.bf16.msra.mxu0 %v959
        %1210 = vmatprep.subr.bf16.mxu0 %v1020
        %1211 = vmatpush2.bf16.msra.mxu0 %v1019
        %1212 = vmatprep.subr.bf16.mxu0 %v1016
        %1213 = vmatpush2.bf16.msra.mxu0 %v1015
        %1214 = vmatprep.subr.bf16.mxu0 %v1012
        %1215 = vmatpush2.bf16.msra.mxu0 %v1011
        %1216 = vmatprep.subr.bf16.mxu0 %v1008
        %1217 = vmatpush2.bf16.msra.mxu0 %v1007
        %1218 = vmatprep.subr.bf16.mxu0 %v1004
        %1219 = vmatpush2.bf16.msra.mxu0 %v1003
        %1220 = vmatprep.subr.bf16.mxu0 %v1000
        %1221 = vmatpush2.bf16.msra.mxu0 %v999
        %1222 = vmatprep.subr.bf16.mxu0 %v996
        %1223 = vmatpush2.bf16.msra.mxu0 %v995
        %1224 = vmatprep.subr.bf16.mxu0 %v992
        %1225 = vmatpush2.bf16.msra.mxu0 %v991
        %1226 = vmatprep.mubr.bf16.mxu0 %v360
        %1227 = vmatmul.mubr.bf16.gmra.mxu0 %v359
        %v1228 = vpop.f32.mrf.mxu0
        %v1229 = vadd.f32 %v1186, %v1228
        %v1230 = vpop.f32.mrf.mxu0
        %v1231 = vadd.f32 %v1188, %v1230
        %v1232 = vpop.f32.mrf.mxu0
        %v1233 = vadd.f32 %v1190, %v1232
        %v1234 = vpop.f32.mrf.mxu0
        %v1235 = vadd.f32 %v1192, %v1234
        %1236 = vdwg.mxu0
        %1237 = vmatprep.subr.bf16.mxu0 %v926
        %1238 = vmatpush1.bf16.msra.mxu0 %v925
        %1239 = vmatprep.subr.bf16.mxu0 %v922
        %1240 = vmatpush1.bf16.msra.mxu0 %v921
        %1241 = vmatprep.subr.bf16.mxu0 %v918
        %1242 = vmatpush1.bf16.msra.mxu0 %v917
        %1243 = vmatprep.subr.bf16.mxu0 %v914
        %1244 = vmatpush1.bf16.msra.mxu0 %v913
        %1245 = vmatprep.subr.bf16.mxu0 %v910
        %1246 = vmatpush1.bf16.msra.mxu0 %v909
        %1247 = vmatprep.subr.bf16.mxu0 %v906
        %1248 = vmatpush1.bf16.msra.mxu0 %v905
        %1249 = vmatprep.subr.bf16.mxu0 %v902
        %1250 = vmatpush1.bf16.msra.mxu0 %v901
        %1251 = vmatprep.subr.bf16.mxu0 %v898
        %1252 = vmatpush1.bf16.msra.mxu0 %v897
        %1253 = vmatprep.subr.bf16.mxu0 %v958
        %1254 = vmatpush2.bf16.msra.mxu0 %v957
        %1255 = vmatprep.subr.bf16.mxu0 %v954
        %1256 = vmatpush2.bf16.msra.mxu0 %v953
        %1257 = vmatprep.subr.bf16.mxu0 %v950
        %1258 = vmatpush2.bf16.msra.mxu0 %v949
        %1259 = vmatprep.subr.bf16.mxu0 %v946
        %1260 = vmatpush2.bf16.msra.mxu0 %v945
        %1261 = vmatprep.subr.bf16.mxu0 %v942
        %1262 = vmatpush2.bf16.msra.mxu0 %v941
        %1263 = vmatprep.subr.bf16.mxu0 %v938
        %1264 = vmatpush2.bf16.msra.mxu0 %v937
        %1265 = vmatprep.subr.bf16.mxu0 %v934
        %1266 = vmatpush2.bf16.msra.mxu0 %v933
        %1267 = vmatprep.subr.bf16.mxu0 %v930
        %1268 = vmatpush2.bf16.msra.mxu0 %v929
        %1269 = vmatprep.mubr.bf16.mxu0 %v358
        %1270 = vmatmul.mubr.bf16.gmra.mxu0 %v357
        %v1271 = vpop.f32.mrf.mxu0
        %v1272 = vadd.f32 %v502, %v1271
        %v1273 = vpop.f32.mrf.mxu0
        %v1274 = vadd.f32 %v506, %v1273
        %v1275 = vpop.f32.mrf.mxu0
        %v1276 = vadd.f32 %v502, %v1275
        %v1277 = vpop.f32.mrf.mxu0
        %v1278 = vadd.f32 %v506, %v1277
        %1279 = vdwg.mxu0
        %1280 = vmatprep.subr.bf16.mxu0 %v990
        %1281 = vmatpush1.bf16.msra.mxu0 %v989
        %1282 = vmatprep.subr.bf16.mxu0 %v986
        %1283 = vmatpush1.bf16.msra.mxu0 %v985
        %1284 = vmatprep.subr.bf16.mxu0 %v982
        %1285 = vmatpush1.bf16.msra.mxu0 %v981
        %1286 = vmatprep.subr.bf16.mxu0 %v978
        %1287 = vmatpush1.bf16.msra.mxu0 %v977
        %1288 = vmatprep.subr.bf16.mxu0 %v974
        %1289 = vmatpush1.bf16.msra.mxu0 %v973
        %1290 = vmatprep.subr.bf16.mxu0 %v970
        %1291 = vmatpush1.bf16.msra.mxu0 %v969
        %1292 = vmatprep.subr.bf16.mxu0 %v966
        %1293 = vmatpush1.bf16.msra.mxu0 %v965
        %1294 = vmatprep.subr.bf16.mxu0 %v962
        %1295 = vmatpush1.bf16.msra.mxu0 %v961
        %1296 = vmatprep.subr.bf16.mxu0 %v1022
        %1297 = vmatpush2.bf16.msra.mxu0 %v1021
        %1298 = vmatprep.subr.bf16.mxu0 %v1018
        %1299 = vmatpush2.bf16.msra.mxu0 %v1017
        %1300 = vmatprep.subr.bf16.mxu0 %v1014
        %1301 = vmatpush2.bf16.msra.mxu0 %v1013
        %1302 = vmatprep.subr.bf16.mxu0 %v1010
        %1303 = vmatpush2.bf16.msra.mxu0 %v1009
        %1304 = vmatprep.subr.bf16.mxu0 %v1006
        %1305 = vmatpush2.bf16.msra.mxu0 %v1005
        %1306 = vmatprep.subr.bf16.mxu0 %v1002
        %1307 = vmatpush2.bf16.msra.mxu0 %v1001
        %1308 = vmatprep.subr.bf16.mxu0 %v998
        %1309 = vmatpush2.bf16.msra.mxu0 %v997
        %1310 = vmatprep.subr.bf16.mxu0 %v994
        %1311 = vmatpush2.bf16.msra.mxu0 %v993
        %1312 = vmatprep.mubr.bf16.mxu0 %v360
        %1313 = vmatmul.mubr.bf16.gmra.mxu0 %v359
        %v1314 = vpop.f32.mrf.mxu0
        %v1315 = vadd.f32 %v1272, %v1314
        %v1316 = vpop.f32.mrf.mxu0
        %v1317 = vadd.f32 %v1274, %v1316
        %v1318 = vpop.f32.mrf.mxu0
        %v1319 = vadd.f32 %v1276, %v1318
        %v1320 = vpop.f32.mrf.mxu0
        %v1321 = vadd.f32 %v1278, %v1320
        %1322 = vdwg.mxu0
        %v1323 = vmax.f32 %v1229, 0.0
        %v1324 = vmax.f32 %v1231, 0.0
        %v1325 = vmax.f32 %v1315, 0.0
        %v1326 = vmax.f32 %v1317, 0.0
        %v1327 = vmax.f32 %v1233, 0.0
        %v1328 = vmax.f32 %v1235, 0.0
        %v1329 = vmax.f32 %v1319, 0.0
        %v1330 = vmax.f32 %v1321, 0.0
        %v1331 = vpack.c.bf16 %v1327, %v1323
        %v1332 = vpack.c.bf16 %v1328, %v1324
        %v1333 = vpack.c.bf16 %v1329, %v1325
        %v1334 = vpack.c.bf16 %v1330, %v1326
        %v1335 = vld [vmem:[#allocation2] sm:$0xff]
        %v1336 = vld [vmem:[#allocation2 + $0x8] sm:$0xff]
        %v1337 = vld [vmem:[#allocation2 + $0x10] sm:$0xff]
        %v1338 = vld [vmem:[#allocation2 + $0x18] sm:$0xff]
        %v1339 = vld [vmem:[#allocation2 + $0x20] sm:$0xff]
        %v1340 = vld [vmem:[#allocation2 + $0x28] sm:$0xff]
        %v1341 = vld [vmem:[#allocation2 + $0x30] sm:$0xff]
        %v1342 = vld [vmem:[#allocation2 + $0x38] sm:$0xff]
        %v1343 = vld [vmem:[%s298] sm:$0xff]
        %v1344 = vld [vmem:[%s298 + $0x8] sm:$0xff]
        %v1345 = vld [vmem:[%s298 + $0x10] sm:$0xff]
        %v1346 = vld [vmem:[%s298 + $0x18] sm:$0xff]
        %v1347 = vld [vmem:[%s298 + $0x20] sm:$0xff]
        %v1348 = vld [vmem:[%s298 + $0x28] sm:$0xff]
        %v1349 = vld [vmem:[%s298 + $0x30] sm:$0xff]
        %v1350 = vld [vmem:[%s298 + $0x38] sm:$0xff]
        %v1351 = vld [vmem:[%s298 + $0x40] sm:$0xff]
        %v1352 = vld [vmem:[%s298 + $0x48] sm:$0xff]
        %v1353 = vld [vmem:[%s298 + $0x50] sm:$0xff]
        %v1354 = vld [vmem:[%s298 + $0x58] sm:$0xff]
        %v1355 = vld [vmem:[%s298 + $0x60] sm:$0xff]
        %v1356 = vld [vmem:[%s298 + $0x68] sm:$0xff]
        %v1357 = vld [vmem:[%s298 + $0x70] sm:$0xff]
        %v1358 = vld [vmem:[%s298 + $0x78] sm:$0xff]
        %v1359 = vld [vmem:[%s298 + $0x80] sm:$0xff]
        %v1360 = vld [vmem:[%s298 + $0x88] sm:$0xff]
        %v1361 = vld [vmem:[%s298 + $0x90] sm:$0xff]
        %v1362 = vld [vmem:[%s298 + $0x98] sm:$0xff]
        %v1363 = vld [vmem:[%s298 + $0xa0] sm:$0xff]
        %v1364 = vld [vmem:[%s298 + $0xa8] sm:$0xff]
        %v1365 = vld [vmem:[%s298 + $0xb0] sm:$0xff]
        %v1366 = vld [vmem:[%s298 + $0xb8] sm:$0xff]
        %v1367 = vld [vmem:[%s298 + $0xc0] sm:$0xff]
        %v1368 = vld [vmem:[%s298 + $0xc8] sm:$0xff]
        %v1369 = vld [vmem:[%s298 + $0xd0] sm:$0xff]
        %v1370 = vld [vmem:[%s298 + $0xd8] sm:$0xff]
        %v1371 = vld [vmem:[%s298 + $0xe0] sm:$0xff]
        %v1372 = vld [vmem:[%s298 + $0xe8] sm:$0xff]
        %v1373 = vld [vmem:[%s298 + $0xf0] sm:$0xff]
        %v1374 = vld [vmem:[%s298 + $0xf8] sm:$0xff]
        %v1375 = vld [vmem:[%s298 + $0x100] sm:$0xff]
        %v1376 = vld [vmem:[%s298 + $0x108] sm:$0xff]
        %v1377 = vld [vmem:[%s298 + $0x110] sm:$0xff]
        %v1378 = vld [vmem:[%s298 + $0x118] sm:$0xff]
        %v1379 = vld [vmem:[%s298 + $0x120] sm:$0xff]
        %v1380 = vld [vmem:[%s298 + $0x128] sm:$0xff]
        %v1381 = vld [vmem:[%s298 + $0x130] sm:$0xff]
        %v1382 = vld [vmem:[%s298 + $0x138] sm:$0xff]
        %v1383 = vld [vmem:[%s298 + $0x140] sm:$0xff]
        %v1384 = vld [vmem:[%s298 + $0x148] sm:$0xff]
        %v1385 = vld [vmem:[%s298 + $0x150] sm:$0xff]
        %v1386 = vld [vmem:[%s298 + $0x158] sm:$0xff]
        %v1387 = vld [vmem:[%s298 + $0x160] sm:$0xff]
        %v1388 = vld [vmem:[%s298 + $0x168] sm:$0xff]
        %v1389 = vld [vmem:[%s298 + $0x170] sm:$0xff]
        %v1390 = vld [vmem:[%s298 + $0x178] sm:$0xff]
        %v1391 = vld [vmem:[%s298 + $0x180] sm:$0xff]
        %v1392 = vld [vmem:[%s298 + $0x188] sm:$0xff]
        %v1393 = vld [vmem:[%s298 + $0x190] sm:$0xff]
        %v1394 = vld [vmem:[%s298 + $0x198] sm:$0xff]
        %v1395 = vld [vmem:[%s298 + $0x1a0] sm:$0xff]
        %v1396 = vld [vmem:[%s298 + $0x1a8] sm:$0xff]
        %v1397 = vld [vmem:[%s298 + $0x1b0] sm:$0xff]
        %v1398 = vld [vmem:[%s298 + $0x1b8] sm:$0xff]
        %v1399 = vld [vmem:[%s298 + $0x1c0] sm:$0xff]
        %v1400 = vld [vmem:[%s298 + $0x1c8] sm:$0xff]
        %v1401 = vld [vmem:[%s298 + $0x1d0] sm:$0xff]
        %v1402 = vld [vmem:[%s298 + $0x1d8] sm:$0xff]
        %v1403 = vld [vmem:[%s298 + $0x1e0] sm:$0xff]
        %v1404 = vld [vmem:[%s298 + $0x1e8] sm:$0xff]
        %v1405 = vld [vmem:[%s298 + $0x1f0] sm:$0xff]
        %v1406 = vld [vmem:[%s298 + $0x1f8] sm:$0xff]
        %v1407 = vld [vmem:[%s298 + $0x200] sm:$0xff]
        %v1408 = vld [vmem:[%s298 + $0x208] sm:$0xff]
        %v1409 = vld [vmem:[%s298 + $0x210] sm:$0xff]
        %v1410 = vld [vmem:[%s298 + $0x218] sm:$0xff]
        %v1411 = vld [vmem:[%s298 + $0x220] sm:$0xff]
        %v1412 = vld [vmem:[%s298 + $0x228] sm:$0xff]
        %v1413 = vld [vmem:[%s298 + $0x230] sm:$0xff]
        %v1414 = vld [vmem:[%s298 + $0x238] sm:$0xff]
        %v1415 = vld [vmem:[%s298 + $0x240] sm:$0xff]
        %v1416 = vld [vmem:[%s298 + $0x248] sm:$0xff]
        %v1417 = vld [vmem:[%s298 + $0x250] sm:$0xff]
        %v1418 = vld [vmem:[%s298 + $0x258] sm:$0xff]
        %v1419 = vld [vmem:[%s298 + $0x260] sm:$0xff]
        %v1420 = vld [vmem:[%s298 + $0x268] sm:$0xff]
        %v1421 = vld [vmem:[%s298 + $0x270] sm:$0xff]
        %v1422 = vld [vmem:[%s298 + $0x278] sm:$0xff]
        %v1423 = vld [vmem:[%s298 + $0x280] sm:$0xff]
        %v1424 = vld [vmem:[%s298 + $0x288] sm:$0xff]
        %v1425 = vld [vmem:[%s298 + $0x290] sm:$0xff]
        %v1426 = vld [vmem:[%s298 + $0x298] sm:$0xff]
        %v1427 = vld [vmem:[%s298 + $0x2a0] sm:$0xff]
        %v1428 = vld [vmem:[%s298 + $0x2a8] sm:$0xff]
        %v1429 = vld [vmem:[%s298 + $0x2b0] sm:$0xff]
        %v1430 = vld [vmem:[%s298 + $0x2b8] sm:$0xff]
        %v1431 = vld [vmem:[%s298 + $0x2c0] sm:$0xff]
        %v1432 = vld [vmem:[%s298 + $0x2c8] sm:$0xff]
        %v1433 = vld [vmem:[%s298 + $0x2d0] sm:$0xff]
        %v1434 = vld [vmem:[%s298 + $0x2d8] sm:$0xff]
        %v1435 = vld [vmem:[%s298 + $0x2e0] sm:$0xff]
        %v1436 = vld [vmem:[%s298 + $0x2e8] sm:$0xff]
        %v1437 = vld [vmem:[%s298 + $0x2f0] sm:$0xff]
        %v1438 = vld [vmem:[%s298 + $0x2f8] sm:$0xff]
        %v1439 = vld [vmem:[%s298 + $0x300] sm:$0xff]
        %v1440 = vld [vmem:[%s298 + $0x308] sm:$0xff]
        %v1441 = vld [vmem:[%s298 + $0x310] sm:$0xff]
        %v1442 = vld [vmem:[%s298 + $0x318] sm:$0xff]
        %v1443 = vld [vmem:[%s298 + $0x320] sm:$0xff]
        %v1444 = vld [vmem:[%s298 + $0x328] sm:$0xff]
        %v1445 = vld [vmem:[%s298 + $0x330] sm:$0xff]
        %v1446 = vld [vmem:[%s298 + $0x338] sm:$0xff]
        %v1447 = vld [vmem:[%s298 + $0x340] sm:$0xff]
        %v1448 = vld [vmem:[%s298 + $0x348] sm:$0xff]
        %v1449 = vld [vmem:[%s298 + $0x350] sm:$0xff]
        %v1450 = vld [vmem:[%s298 + $0x358] sm:$0xff]
        %v1451 = vld [vmem:[%s298 + $0x360] sm:$0xff]
        %v1452 = vld [vmem:[%s298 + $0x368] sm:$0xff]
        %v1453 = vld [vmem:[%s298 + $0x370] sm:$0xff]
        %v1454 = vld [vmem:[%s298 + $0x378] sm:$0xff]
        %v1455 = vld [vmem:[%s298 + $0x380] sm:$0xff]
        %v1456 = vld [vmem:[%s298 + $0x388] sm:$0xff]
        %v1457 = vld [vmem:[%s298 + $0x390] sm:$0xff]
        %v1458 = vld [vmem:[%s298 + $0x398] sm:$0xff]
        %v1459 = vld [vmem:[%s298 + $0x3a0] sm:$0xff]
        %v1460 = vld [vmem:[%s298 + $0x3a8] sm:$0xff]
        %v1461 = vld [vmem:[%s298 + $0x3b0] sm:$0xff]
        %v1462 = vld [vmem:[%s298 + $0x3b8] sm:$0xff]
        %v1463 = vld [vmem:[%s298 + $0x3c0] sm:$0xff]
        %v1464 = vld [vmem:[%s298 + $0x3c8] sm:$0xff]
        %v1465 = vld [vmem:[%s298 + $0x3d0] sm:$0xff]
        %v1466 = vld [vmem:[%s298 + $0x3d8] sm:$0xff]
        %v1467 = vld [vmem:[%s298 + $0x3e0] sm:$0xff]
        %v1468 = vld [vmem:[%s298 + $0x3e8] sm:$0xff]
        %v1469 = vld [vmem:[%s298 + $0x3f0] sm:$0xff]
        %v1470 = vld [vmem:[%s298 + $0x3f8] sm:$0xff]
        %v1599 = vunpack.c.l.b16 %v1343
        %v1600 = vunpack.c.h.b16 %v1343
        %v1601 = vunpack.c.l.b16 %v1344
        %v1602 = vunpack.c.h.b16 %v1344
        %v1603 = vunpack.c.l.b16 %v1345
        %v1604 = vunpack.c.h.b16 %v1345
        %v1605 = vunpack.c.l.b16 %v1346
        %v1606 = vunpack.c.h.b16 %v1346
        %v1607 = vunpack.c.l.b16 %v1347
        %v1608 = vunpack.c.h.b16 %v1347
        %v1609 = vunpack.c.l.b16 %v1348
        %v1610 = vunpack.c.h.b16 %v1348
        %v1611 = vunpack.c.l.b16 %v1349
        %v1612 = vunpack.c.h.b16 %v1349
        %v1613 = vunpack.c.l.b16 %v1350
        %v1614 = vunpack.c.h.b16 %v1350
        %v1615 = vunpack.c.l.b16 %v1351
        %v1616 = vunpack.c.h.b16 %v1351
        %v1617 = vunpack.c.l.b16 %v1352
        %v1618 = vunpack.c.h.b16 %v1352
        %v1619 = vunpack.c.l.b16 %v1353
        %v1620 = vunpack.c.h.b16 %v1353
        %v1621 = vunpack.c.l.b16 %v1354
        %v1622 = vunpack.c.h.b16 %v1354
        %v1623 = vunpack.c.l.b16 %v1355
        %v1624 = vunpack.c.h.b16 %v1355
        %v1625 = vunpack.c.l.b16 %v1356
        %v1626 = vunpack.c.h.b16 %v1356
        %v1627 = vunpack.c.l.b16 %v1357
        %v1628 = vunpack.c.h.b16 %v1357
        %v1629 = vunpack.c.l.b16 %v1358
        %v1630 = vunpack.c.h.b16 %v1358
        %v1631 = vunpack.c.l.b16 %v1359
        %v1632 = vunpack.c.h.b16 %v1359
        %v1633 = vunpack.c.l.b16 %v1360
        %v1634 = vunpack.c.h.b16 %v1360
        %v1635 = vunpack.c.l.b16 %v1361
        %v1636 = vunpack.c.h.b16 %v1361
        %v1637 = vunpack.c.l.b16 %v1362
        %v1638 = vunpack.c.h.b16 %v1362
        %v1639 = vunpack.c.l.b16 %v1363
        %v1640 = vunpack.c.h.b16 %v1363
        %v1641 = vunpack.c.l.b16 %v1364
        %v1642 = vunpack.c.h.b16 %v1364
        %v1643 = vunpack.c.l.b16 %v1365
        %v1644 = vunpack.c.h.b16 %v1365
        %v1645 = vunpack.c.l.b16 %v1366
        %v1646 = vunpack.c.h.b16 %v1366
        %v1647 = vunpack.c.l.b16 %v1367
        %v1648 = vunpack.c.h.b16 %v1367
        %v1649 = vunpack.c.l.b16 %v1368
        %v1650 = vunpack.c.h.b16 %v1368
        %v1651 = vunpack.c.l.b16 %v1369
        %v1652 = vunpack.c.h.b16 %v1369
        %v1653 = vunpack.c.l.b16 %v1370
        %v1654 = vunpack.c.h.b16 %v1370
        %v1655 = vunpack.c.l.b16 %v1371
        %v1656 = vunpack.c.h.b16 %v1371
        %v1657 = vunpack.c.l.b16 %v1372
        %v1658 = vunpack.c.h.b16 %v1372
        %v1659 = vunpack.c.l.b16 %v1373
        %v1660 = vunpack.c.h.b16 %v1373
        %v1661 = vunpack.c.l.b16 %v1374
        %v1662 = vunpack.c.h.b16 %v1374
        %v1663 = vunpack.c.l.b16 %v1375
        %v1664 = vunpack.c.h.b16 %v1375
        %v1665 = vunpack.c.l.b16 %v1376
        %v1666 = vunpack.c.h.b16 %v1376
        %v1667 = vunpack.c.l.b16 %v1377
        %v1668 = vunpack.c.h.b16 %v1377
        %v1669 = vunpack.c.l.b16 %v1378
        %v1670 = vunpack.c.h.b16 %v1378
        %v1671 = vunpack.c.l.b16 %v1379
        %v1672 = vunpack.c.h.b16 %v1379
        %v1673 = vunpack.c.l.b16 %v1380
        %v1674 = vunpack.c.h.b16 %v1380
        %v1675 = vunpack.c.l.b16 %v1381
        %v1676 = vunpack.c.h.b16 %v1381
        %v1677 = vunpack.c.l.b16 %v1382
        %v1678 = vunpack.c.h.b16 %v1382
        %v1679 = vunpack.c.l.b16 %v1383
        %v1680 = vunpack.c.h.b16 %v1383
        %v1681 = vunpack.c.l.b16 %v1384
        %v1682 = vunpack.c.h.b16 %v1384
        %v1683 = vunpack.c.l.b16 %v1385
        %v1684 = vunpack.c.h.b16 %v1385
        %v1685 = vunpack.c.l.b16 %v1386
        %v1686 = vunpack.c.h.b16 %v1386
        %v1687 = vunpack.c.l.b16 %v1387
        %v1688 = vunpack.c.h.b16 %v1387
        %v1689 = vunpack.c.l.b16 %v1388
        %v1690 = vunpack.c.h.b16 %v1388
        %v1691 = vunpack.c.l.b16 %v1389
        %v1692 = vunpack.c.h.b16 %v1389
        %v1693 = vunpack.c.l.b16 %v1390
        %v1694 = vunpack.c.h.b16 %v1390
        %v1695 = vunpack.c.l.b16 %v1391
        %v1696 = vunpack.c.h.b16 %v1391
        %v1697 = vunpack.c.l.b16 %v1392
        %v1698 = vunpack.c.h.b16 %v1392
        %v1699 = vunpack.c.l.b16 %v1393
        %v1700 = vunpack.c.h.b16 %v1393
        %v1701 = vunpack.c.l.b16 %v1394
        %v1702 = vunpack.c.h.b16 %v1394
        %v1703 = vunpack.c.l.b16 %v1395
        %v1704 = vunpack.c.h.b16 %v1395
        %v1705 = vunpack.c.l.b16 %v1396
        %v1706 = vunpack.c.h.b16 %v1396
        %v1707 = vunpack.c.l.b16 %v1397
        %v1708 = vunpack.c.h.b16 %v1397
        %v1709 = vunpack.c.l.b16 %v1398
        %v1710 = vunpack.c.h.b16 %v1398
        %v1711 = vunpack.c.l.b16 %v1399
        %v1712 = vunpack.c.h.b16 %v1399
        %v1713 = vunpack.c.l.b16 %v1400
        %v1714 = vunpack.c.h.b16 %v1400
        %v1715 = vunpack.c.l.b16 %v1401
        %v1716 = vunpack.c.h.b16 %v1401
        %v1717 = vunpack.c.l.b16 %v1402
        %v1718 = vunpack.c.h.b16 %v1402
        %v1719 = vunpack.c.l.b16 %v1403
        %v1720 = vunpack.c.h.b16 %v1403
        %v1721 = vunpack.c.l.b16 %v1404
        %v1722 = vunpack.c.h.b16 %v1404
        %v1723 = vunpack.c.l.b16 %v1405
        %v1724 = vunpack.c.h.b16 %v1405
        %v1725 = vunpack.c.l.b16 %v1406
        %v1726 = vunpack.c.h.b16 %v1406
        %v1727 = vunpack.c.l.b16 %v1407
        %v1728 = vunpack.c.h.b16 %v1407
        %v1729 = vunpack.c.l.b16 %v1408
        %v1730 = vunpack.c.h.b16 %v1408
        %v1731 = vunpack.c.l.b16 %v1409
        %v1732 = vunpack.c.h.b16 %v1409
        %v1733 = vunpack.c.l.b16 %v1410
        %v1734 = vunpack.c.h.b16 %v1410
        %v1735 = vunpack.c.l.b16 %v1411
        %v1736 = vunpack.c.h.b16 %v1411
        %v1737 = vunpack.c.l.b16 %v1412
        %v1738 = vunpack.c.h.b16 %v1412
        %v1739 = vunpack.c.l.b16 %v1413
        %v1740 = vunpack.c.h.b16 %v1413
        %v1741 = vunpack.c.l.b16 %v1414
        %v1742 = vunpack.c.h.b16 %v1414
        %v1743 = vunpack.c.l.b16 %v1415
        %v1744 = vunpack.c.h.b16 %v1415
        %v1745 = vunpack.c.l.b16 %v1416
        %v1746 = vunpack.c.h.b16 %v1416
        %v1747 = vunpack.c.l.b16 %v1417
        %v1748 = vunpack.c.h.b16 %v1417
        %v1749 = vunpack.c.l.b16 %v1418
        %v1750 = vunpack.c.h.b16 %v1418
        %v1751 = vunpack.c.l.b16 %v1419
        %v1752 = vunpack.c.h.b16 %v1419
        %v1753 = vunpack.c.l.b16 %v1420
        %v1754 = vunpack.c.h.b16 %v1420
        %v1755 = vunpack.c.l.b16 %v1421
        %v1756 = vunpack.c.h.b16 %v1421
        %v1757 = vunpack.c.l.b16 %v1422
        %v1758 = vunpack.c.h.b16 %v1422
        %v1759 = vunpack.c.l.b16 %v1423
        %v1760 = vunpack.c.h.b16 %v1423
        %v1761 = vunpack.c.l.b16 %v1424
        %v1762 = vunpack.c.h.b16 %v1424
        %v1763 = vunpack.c.l.b16 %v1425
        %v1764 = vunpack.c.h.b16 %v1425
        %v1765 = vunpack.c.l.b16 %v1426
        %v1766 = vunpack.c.h.b16 %v1426
        %v1767 = vunpack.c.l.b16 %v1427
        %v1768 = vunpack.c.h.b16 %v1427
        %v1769 = vunpack.c.l.b16 %v1428
        %v1770 = vunpack.c.h.b16 %v1428
        %v1771 = vunpack.c.l.b16 %v1429
        %v1772 = vunpack.c.h.b16 %v1429
        %v1773 = vunpack.c.l.b16 %v1430
        %v1774 = vunpack.c.h.b16 %v1430
        %v1775 = vunpack.c.l.b16 %v1431
        %v1776 = vunpack.c.h.b16 %v1431
        %v1777 = vunpack.c.l.b16 %v1432
        %v1778 = vunpack.c.h.b16 %v1432
        %v1779 = vunpack.c.l.b16 %v1433
        %v1780 = vunpack.c.h.b16 %v1433
        %v1781 = vunpack.c.l.b16 %v1434
        %v1782 = vunpack.c.h.b16 %v1434
        %v1783 = vunpack.c.l.b16 %v1435
        %v1784 = vunpack.c.h.b16 %v1435
        %v1785 = vunpack.c.l.b16 %v1436
        %v1786 = vunpack.c.h.b16 %v1436
        %v1787 = vunpack.c.l.b16 %v1437
        %v1788 = vunpack.c.h.b16 %v1437
        %v1789 = vunpack.c.l.b16 %v1438
        %v1790 = vunpack.c.h.b16 %v1438
        %v1791 = vunpack.c.l.b16 %v1439
        %v1792 = vunpack.c.h.b16 %v1439
        %v1793 = vunpack.c.l.b16 %v1440
        %v1794 = vunpack.c.h.b16 %v1440
        %v1795 = vunpack.c.l.b16 %v1441
        %v1796 = vunpack.c.h.b16 %v1441
        %v1797 = vunpack.c.l.b16 %v1442
        %v1798 = vunpack.c.h.b16 %v1442
        %v1799 = vunpack.c.l.b16 %v1443
        %v1800 = vunpack.c.h.b16 %v1443
        %v1801 = vunpack.c.l.b16 %v1444
        %v1802 = vunpack.c.h.b16 %v1444
        %v1803 = vunpack.c.l.b16 %v1445
        %v1804 = vunpack.c.h.b16 %v1445
        %v1805 = vunpack.c.l.b16 %v1446
        %v1806 = vunpack.c.h.b16 %v1446
        %v1807 = vunpack.c.l.b16 %v1447
        %v1808 = vunpack.c.h.b16 %v1447
        %v1809 = vunpack.c.l.b16 %v1448
        %v1810 = vunpack.c.h.b16 %v1448
        %v1811 = vunpack.c.l.b16 %v1449
        %v1812 = vunpack.c.h.b16 %v1449
        %v1813 = vunpack.c.l.b16 %v1450
        %v1814 = vunpack.c.h.b16 %v1450
        %v1815 = vunpack.c.l.b16 %v1451
        %v1816 = vunpack.c.h.b16 %v1451
        %v1817 = vunpack.c.l.b16 %v1452
        %v1818 = vunpack.c.h.b16 %v1452
        %v1819 = vunpack.c.l.b16 %v1453
        %v1820 = vunpack.c.h.b16 %v1453
        %v1821 = vunpack.c.l.b16 %v1454
        %v1822 = vunpack.c.h.b16 %v1454
        %v1823 = vunpack.c.l.b16 %v1455
        %v1824 = vunpack.c.h.b16 %v1455
        %v1825 = vunpack.c.l.b16 %v1456
        %v1826 = vunpack.c.h.b16 %v1456
        %v1827 = vunpack.c.l.b16 %v1457
        %v1828 = vunpack.c.h.b16 %v1457
        %v1829 = vunpack.c.l.b16 %v1458
        %v1830 = vunpack.c.h.b16 %v1458
        %v1831 = vunpack.c.l.b16 %v1459
        %v1832 = vunpack.c.h.b16 %v1459
        %v1833 = vunpack.c.l.b16 %v1460
        %v1834 = vunpack.c.h.b16 %v1460
        %v1835 = vunpack.c.l.b16 %v1461
        %v1836 = vunpack.c.h.b16 %v1461
        %v1837 = vunpack.c.l.b16 %v1462
        %v1838 = vunpack.c.h.b16 %v1462
        %v1839 = vunpack.c.l.b16 %v1463
        %v1840 = vunpack.c.h.b16 %v1463
        %v1841 = vunpack.c.l.b16 %v1464
        %v1842 = vunpack.c.h.b16 %v1464
        %v1843 = vunpack.c.l.b16 %v1465
        %v1844 = vunpack.c.h.b16 %v1465
        %v1845 = vunpack.c.l.b16 %v1466
        %v1846 = vunpack.c.h.b16 %v1466
        %v1847 = vunpack.c.l.b16 %v1467
        %v1848 = vunpack.c.h.b16 %v1467
        %v1849 = vunpack.c.l.b16 %v1468
        %v1850 = vunpack.c.h.b16 %v1468
        %v1851 = vunpack.c.l.b16 %v1469
        %v1852 = vunpack.c.h.b16 %v1469
        %v1853 = vunpack.c.l.b16 %v1470
        %v1854 = vunpack.c.h.b16 %v1470
        %v1855 = vpack.c.b16 %v1603, %v1599
        %v1856 = vpack.c.b16 %v1604, %v1600
        %v1857 = vpack.c.b16 %v1605, %v1601
        %v1858 = vpack.c.b16 %v1606, %v1602
        %v1859 = vpack.c.b16 %v1611, %v1607
        %v1860 = vpack.c.b16 %v1612, %v1608
        %v1861 = vpack.c.b16 %v1613, %v1609
        %v1862 = vpack.c.b16 %v1614, %v1610
        %v1863 = vpack.c.b16 %v1619, %v1615
        %v1864 = vpack.c.b16 %v1620, %v1616
        %v1865 = vpack.c.b16 %v1621, %v1617
        %v1866 = vpack.c.b16 %v1622, %v1618
        %v1867 = vpack.c.b16 %v1627, %v1623
        %v1868 = vpack.c.b16 %v1628, %v1624
        %v1869 = vpack.c.b16 %v1629, %v1625
        %v1870 = vpack.c.b16 %v1630, %v1626
        %v1871 = vpack.c.b16 %v1635, %v1631
        %v1872 = vpack.c.b16 %v1636, %v1632
        %v1873 = vpack.c.b16 %v1637, %v1633
        %v1874 = vpack.c.b16 %v1638, %v1634
        %v1875 = vpack.c.b16 %v1643, %v1639
        %v1876 = vpack.c.b16 %v1644, %v1640
        %v1877 = vpack.c.b16 %v1645, %v1641
        %v1878 = vpack.c.b16 %v1646, %v1642
        %v1879 = vpack.c.b16 %v1651, %v1647
        %v1880 = vpack.c.b16 %v1652, %v1648
        %v1881 = vpack.c.b16 %v1653, %v1649
        %v1882 = vpack.c.b16 %v1654, %v1650
        %v1883 = vpack.c.b16 %v1659, %v1655
        %v1884 = vpack.c.b16 %v1660, %v1656
        %v1885 = vpack.c.b16 %v1661, %v1657
        %v1886 = vpack.c.b16 %v1662, %v1658
        %v1887 = vpack.c.b16 %v1667, %v1663
        %v1888 = vpack.c.b16 %v1668, %v1664
        %v1889 = vpack.c.b16 %v1669, %v1665
        %v1890 = vpack.c.b16 %v1670, %v1666
        %v1891 = vpack.c.b16 %v1675, %v1671
        %v1892 = vpack.c.b16 %v1676, %v1672
        %v1893 = vpack.c.b16 %v1677, %v1673
        %v1894 = vpack.c.b16 %v1678, %v1674
        %v1895 = vpack.c.b16 %v1683, %v1679
        %v1896 = vpack.c.b16 %v1684, %v1680
        %v1897 = vpack.c.b16 %v1685, %v1681
        %v1898 = vpack.c.b16 %v1686, %v1682
        %v1899 = vpack.c.b16 %v1691, %v1687
        %v1900 = vpack.c.b16 %v1692, %v1688
        %v1901 = vpack.c.b16 %v1693, %v1689
        %v1902 = vpack.c.b16 %v1694, %v1690
        %v1903 = vpack.c.b16 %v1699, %v1695
        %v1904 = vpack.c.b16 %v1700, %v1696
        %v1905 = vpack.c.b16 %v1701, %v1697
        %v1906 = vpack.c.b16 %v1702, %v1698
        %v1907 = vpack.c.b16 %v1707, %v1703
        %v1908 = vpack.c.b16 %v1708, %v1704
        %v1909 = vpack.c.b16 %v1709, %v1705
        %v1910 = vpack.c.b16 %v1710, %v1706
        %v1911 = vpack.c.b16 %v1715, %v1711
        %v1912 = vpack.c.b16 %v1716, %v1712
        %v1913 = vpack.c.b16 %v1717, %v1713
        %v1914 = vpack.c.b16 %v1718, %v1714
        %v1915 = vpack.c.b16 %v1723, %v1719
        %v1916 = vpack.c.b16 %v1724, %v1720
        %v1917 = vpack.c.b16 %v1725, %v1721
        %v1918 = vpack.c.b16 %v1726, %v1722
        %v1919 = vpack.c.b16 %v1731, %v1727
        %v1920 = vpack.c.b16 %v1732, %v1728
        %v1921 = vpack.c.b16 %v1733, %v1729
        %v1922 = vpack.c.b16 %v1734, %v1730
        %v1923 = vpack.c.b16 %v1739, %v1735
        %v1924 = vpack.c.b16 %v1740, %v1736
        %v1925 = vpack.c.b16 %v1741, %v1737
        %v1926 = vpack.c.b16 %v1742, %v1738
        %v1927 = vpack.c.b16 %v1747, %v1743
        %v1928 = vpack.c.b16 %v1748, %v1744
        %v1929 = vpack.c.b16 %v1749, %v1745
        %v1930 = vpack.c.b16 %v1750, %v1746
        %v1931 = vpack.c.b16 %v1755, %v1751
        %v1932 = vpack.c.b16 %v1756, %v1752
        %v1933 = vpack.c.b16 %v1757, %v1753
        %v1934 = vpack.c.b16 %v1758, %v1754
        %v1935 = vpack.c.b16 %v1763, %v1759
        %v1936 = vpack.c.b16 %v1764, %v1760
        %v1937 = vpack.c.b16 %v1765, %v1761
        %v1938 = vpack.c.b16 %v1766, %v1762
        %v1939 = vpack.c.b16 %v1771, %v1767
        %v1940 = vpack.c.b16 %v1772, %v1768
        %v1941 = vpack.c.b16 %v1773, %v1769
        %v1942 = vpack.c.b16 %v1774, %v1770
        %v1943 = vpack.c.b16 %v1779, %v1775
        %v1944 = vpack.c.b16 %v1780, %v1776
        %v1945 = vpack.c.b16 %v1781, %v1777
        %v1946 = vpack.c.b16 %v1782, %v1778
        %v1947 = vpack.c.b16 %v1787, %v1783
        %v1948 = vpack.c.b16 %v1788, %v1784
        %v1949 = vpack.c.b16 %v1789, %v1785
        %v1950 = vpack.c.b16 %v1790, %v1786
        %v1951 = vpack.c.b16 %v1795, %v1791
        %v1952 = vpack.c.b16 %v1796, %v1792
        %v1953 = vpack.c.b16 %v1797, %v1793
        %v1954 = vpack.c.b16 %v1798, %v1794
        %v1955 = vpack.c.b16 %v1803, %v1799
        %v1956 = vpack.c.b16 %v1804, %v1800
        %v1957 = vpack.c.b16 %v1805, %v1801
        %v1958 = vpack.c.b16 %v1806, %v1802
        %v1959 = vpack.c.b16 %v1811, %v1807
        %v1960 = vpack.c.b16 %v1812, %v1808
        %v1961 = vpack.c.b16 %v1813, %v1809
        %v1962 = vpack.c.b16 %v1814, %v1810
        %v1963 = vpack.c.b16 %v1819, %v1815
        %v1964 = vpack.c.b16 %v1820, %v1816
        %v1965 = vpack.c.b16 %v1821, %v1817
        %v1966 = vpack.c.b16 %v1822, %v1818
        %v1967 = vpack.c.b16 %v1827, %v1823
        %v1968 = vpack.c.b16 %v1828, %v1824
        %v1969 = vpack.c.b16 %v1829, %v1825
        %v1970 = vpack.c.b16 %v1830, %v1826
        %v1971 = vpack.c.b16 %v1835, %v1831
        %v1972 = vpack.c.b16 %v1836, %v1832
        %v1973 = vpack.c.b16 %v1837, %v1833
        %v1974 = vpack.c.b16 %v1838, %v1834
        %v1975 = vpack.c.b16 %v1843, %v1839
        %v1976 = vpack.c.b16 %v1844, %v1840
        %v1977 = vpack.c.b16 %v1845, %v1841
        %v1978 = vpack.c.b16 %v1846, %v1842
        %v1979 = vpack.c.b16 %v1851, %v1847
        %v1980 = vpack.c.b16 %v1852, %v1848
        %v1981 = vpack.c.b16 %v1853, %v1849
        %v1982 = vpack.c.b16 %v1854, %v1850
        %2111 = vmatprep.subr.bf16.mxu0 %v1884
        %2112 = vmatpush1.bf16.msra.mxu0 %v1883
        %2113 = vmatprep.subr.bf16.mxu0 %v1880
        %2114 = vmatpush1.bf16.msra.mxu0 %v1879
        %2115 = vmatprep.subr.bf16.mxu0 %v1876
        %2116 = vmatpush1.bf16.msra.mxu0 %v1875
        %2117 = vmatprep.subr.bf16.mxu0 %v1872
        %2118 = vmatpush1.bf16.msra.mxu0 %v1871
        %2119 = vmatprep.subr.bf16.mxu0 %v1868
        %2120 = vmatpush1.bf16.msra.mxu0 %v1867
        %2121 = vmatprep.subr.bf16.mxu0 %v1864
        %2122 = vmatpush1.bf16.msra.mxu0 %v1863
        %2123 = vmatprep.subr.bf16.mxu0 %v1860
        %2124 = vmatpush1.bf16.msra.mxu0 %v1859
        %2125 = vmatprep.subr.bf16.mxu0 %v1856
        %2126 = vmatpush1.bf16.msra.mxu0 %v1855
        %2127 = vmatprep.subr.bf16.mxu0 %v1916
        %2128 = vmatpush2.bf16.msra.mxu0 %v1915
        %2129 = vmatprep.subr.bf16.mxu0 %v1912
        %2130 = vmatpush2.bf16.msra.mxu0 %v1911
        %2131 = vmatprep.subr.bf16.mxu0 %v1908
        %2132 = vmatpush2.bf16.msra.mxu0 %v1907
        %2133 = vmatprep.subr.bf16.mxu0 %v1904
        %2134 = vmatpush2.bf16.msra.mxu0 %v1903
        %2135 = vmatprep.subr.bf16.mxu0 %v1900
        %2136 = vmatpush2.bf16.msra.mxu0 %v1899
        %2137 = vmatprep.subr.bf16.mxu0 %v1896
        %2138 = vmatpush2.bf16.msra.mxu0 %v1895
        %2139 = vmatprep.subr.bf16.mxu0 %v1892
        %2140 = vmatpush2.bf16.msra.mxu0 %v1891
        %2141 = vmatprep.subr.bf16.mxu0 %v1888
        %2142 = vmatpush2.bf16.msra.mxu0 %v1887
        %2143 = vmatprep.mubr.bf16.mxu0 %v1332
        %2144 = vmatmul.mubr.bf16.gmra.mxu0 %v1331
        %v2145 = vpop.f32.mrf.mxu0
        %v2146 = vadd.f32 0.0, %v2145
        %v2147 = vpop.f32.mrf.mxu0
        %v2148 = vadd.f32 0.0, %v2147
        %v2149 = vpop.f32.mrf.mxu0
        %v2150 = vadd.f32 0.0, %v2149
        %v2151 = vpop.f32.mrf.mxu0
        %v2152 = vadd.f32 0.0, %v2151
        %2153 = vdwg.mxu0
        %2154 = vmatprep.subr.bf16.mxu0 %v1948
        %2155 = vmatpush1.bf16.msra.mxu0 %v1947
        %2156 = vmatprep.subr.bf16.mxu0 %v1944
        %2157 = vmatpush1.bf16.msra.mxu0 %v1943
        %2158 = vmatprep.subr.bf16.mxu0 %v1940
        %2159 = vmatpush1.bf16.msra.mxu0 %v1939
        %2160 = vmatprep.subr.bf16.mxu0 %v1936
        %2161 = vmatpush1.bf16.msra.mxu0 %v1935
        %2162 = vmatprep.subr.bf16.mxu0 %v1932
        %2163 = vmatpush1.bf16.msra.mxu0 %v1931
        %2164 = vmatprep.subr.bf16.mxu0 %v1928
        %2165 = vmatpush1.bf16.msra.mxu0 %v1927
        %2166 = vmatprep.subr.bf16.mxu0 %v1924
        %2167 = vmatpush1.bf16.msra.mxu0 %v1923
        %2168 = vmatprep.subr.bf16.mxu0 %v1920
        %2169 = vmatpush1.bf16.msra.mxu0 %v1919
        %2170 = vmatprep.subr.bf16.mxu0 %v1980
        %2171 = vmatpush2.bf16.msra.mxu0 %v1979
        %2172 = vmatprep.subr.bf16.mxu0 %v1976
        %2173 = vmatpush2.bf16.msra.mxu0 %v1975
        %2174 = vmatprep.subr.bf16.mxu0 %v1972
        %2175 = vmatpush2.bf16.msra.mxu0 %v1971
        %2176 = vmatprep.subr.bf16.mxu0 %v1968
        %2177 = vmatpush2.bf16.msra.mxu0 %v1967
        %2178 = vmatprep.subr.bf16.mxu0 %v1964
        %2179 = vmatpush2.bf16.msra.mxu0 %v1963
        %2180 = vmatprep.subr.bf16.mxu0 %v1960
        %2181 = vmatpush2.bf16.msra.mxu0 %v1959
        %2182 = vmatprep.subr.bf16.mxu0 %v1956
        %2183 = vmatpush2.bf16.msra.mxu0 %v1955
        %2184 = vmatprep.subr.bf16.mxu0 %v1952
        %2185 = vmatpush2.bf16.msra.mxu0 %v1951
        %2186 = vmatprep.mubr.bf16.mxu0 %v1334
        %2187 = vmatmul.mubr.bf16.gmra.mxu0 %v1333
        %v2188 = vpop.f32.mrf.mxu0
        %v2189 = vadd.f32 %v2146, %v2188
        %v2190 = vpop.f32.mrf.mxu0
        %v2191 = vadd.f32 %v2148, %v2190
        %v2192 = vpop.f32.mrf.mxu0
        %v2193 = vadd.f32 %v2150, %v2192
        %v2194 = vpop.f32.mrf.mxu0
        %v2195 = vadd.f32 %v2152, %v2194
        %2196 = vdwg.mxu0
        %2197 = vmatprep.subr.bf16.mxu0 %v1886
        %2198 = vmatpush1.bf16.msra.mxu0 %v1885
        %2199 = vmatprep.subr.bf16.mxu0 %v1882
        %2200 = vmatpush1.bf16.msra.mxu0 %v1881
        %2201 = vmatprep.subr.bf16.mxu0 %v1878
        %2202 = vmatpush1.bf16.msra.mxu0 %v1877
        %2203 = vmatprep.subr.bf16.mxu0 %v1874
        %2204 = vmatpush1.bf16.msra.mxu0 %v1873
        %2205 = vmatprep.subr.bf16.mxu0 %v1870
        %2206 = vmatpush1.bf16.msra.mxu0 %v1869
        %2207 = vmatprep.subr.bf16.mxu0 %v1866
        %2208 = vmatpush1.bf16.msra.mxu0 %v1865
        %2209 = vmatprep.subr.bf16.mxu0 %v1862
        %2210 = vmatpush1.bf16.msra.mxu0 %v1861
        %2211 = vmatprep.subr.bf16.mxu0 %v1858
        %2212 = vmatpush1.bf16.msra.mxu0 %v1857
        %2213 = vmatprep.subr.bf16.mxu0 %v1918
        %2214 = vmatpush2.bf16.msra.mxu0 %v1917
        %2215 = vmatprep.subr.bf16.mxu0 %v1914
        %2216 = vmatpush2.bf16.msra.mxu0 %v1913
        %2217 = vmatprep.subr.bf16.mxu0 %v1910
        %2218 = vmatpush2.bf16.msra.mxu0 %v1909
        %2219 = vmatprep.subr.bf16.mxu0 %v1906
        %2220 = vmatpush2.bf16.msra.mxu0 %v1905
        %2221 = vmatprep.subr.bf16.mxu0 %v1902
        %2222 = vmatpush2.bf16.msra.mxu0 %v1901
        %2223 = vmatprep.subr.bf16.mxu0 %v1898
        %2224 = vmatpush2.bf16.msra.mxu0 %v1897
        %2225 = vmatprep.subr.bf16.mxu0 %v1894
        %2226 = vmatpush2.bf16.msra.mxu0 %v1893
        %2227 = vmatprep.subr.bf16.mxu0 %v1890
        %2228 = vmatpush2.bf16.msra.mxu0 %v1889
        %2229 = vmatprep.mubr.bf16.mxu0 %v1332
        %2230 = vmatmul.mubr.bf16.gmra.mxu0 %v1331
        %v2231 = vpop.f32.mrf.mxu0
        %v2232 = vadd.f32 0.0, %v2231
        %v2233 = vpop.f32.mrf.mxu0
        %v2234 = vadd.f32 0.0, %v2233
        %v2235 = vpop.f32.mrf.mxu0
        %v2236 = vadd.f32 0.0, %v2235
        %v2237 = vpop.f32.mrf.mxu0
        %v2238 = vadd.f32 0.0, %v2237
        %2239 = vdwg.mxu0
        %2240 = vmatprep.subr.bf16.mxu0 %v1950
        %2241 = vmatpush1.bf16.msra.mxu0 %v1949
        %2242 = vmatprep.subr.bf16.mxu0 %v1946
        %2243 = vmatpush1.bf16.msra.mxu0 %v1945
        %2244 = vmatprep.subr.bf16.mxu0 %v1942
        %2245 = vmatpush1.bf16.msra.mxu0 %v1941
        %2246 = vmatprep.subr.bf16.mxu0 %v1938
        %2247 = vmatpush1.bf16.msra.mxu0 %v1937
        %2248 = vmatprep.subr.bf16.mxu0 %v1934
        %2249 = vmatpush1.bf16.msra.mxu0 %v1933
        %2250 = vmatprep.subr.bf16.mxu0 %v1930
        %2251 = vmatpush1.bf16.msra.mxu0 %v1929
        %2252 = vmatprep.subr.bf16.mxu0 %v1926
        %2253 = vmatpush1.bf16.msra.mxu0 %v1925
        %2254 = vmatprep.subr.bf16.mxu0 %v1922
        %2255 = vmatpush1.bf16.msra.mxu0 %v1921
        %2256 = vmatprep.subr.bf16.mxu0 %v1982
        %2257 = vmatpush2.bf16.msra.mxu0 %v1981
        %2258 = vmatprep.subr.bf16.mxu0 %v1978
        %2259 = vmatpush2.bf16.msra.mxu0 %v1977
        %2260 = vmatprep.subr.bf16.mxu0 %v1974
        %2261 = vmatpush2.bf16.msra.mxu0 %v1973
        %2262 = vmatprep.subr.bf16.mxu0 %v1970
        %2263 = vmatpush2.bf16.msra.mxu0 %v1969
        %2264 = vmatprep.subr.bf16.mxu0 %v1966
        %2265 = vmatpush2.bf16.msra.mxu0 %v1965
        %2266 = vmatprep.subr.bf16.mxu0 %v1962
        %2267 = vmatpush2.bf16.msra.mxu0 %v1961
        %2268 = vmatprep.subr.bf16.mxu0 %v1958
        %2269 = vmatpush2.bf16.msra.mxu0 %v1957
        %2270 = vmatprep.subr.bf16.mxu0 %v1954
        %2271 = vmatpush2.bf16.msra.mxu0 %v1953
        %2272 = vmatprep.mubr.bf16.mxu0 %v1334
        %2273 = vmatmul.mubr.bf16.gmra.mxu0 %v1333
        %v2274 = vpop.f32.mrf.mxu0
        %v2275 = vadd.f32 %v2232, %v2274
        %v2276 = vpop.f32.mrf.mxu0
        %v2277 = vadd.f32 %v2234, %v2276
        %v2278 = vpop.f32.mrf.mxu0
        %v2279 = vadd.f32 %v2236, %v2278
        %v2280 = vpop.f32.mrf.mxu0
        %v2281 = vadd.f32 %v2238, %v2280
        %2282 = vdwg.mxu0
        %v2283 = vadd.f32 %v1335, %v2189
        %v2284 = vadd.f32 %v1336, %v2191
        %v2285 = vadd.f32 %v1337, %v2275
        %v2286 = vadd.f32 %v1338, %v2277
        %v2287 = vadd.f32 %v1339, %v2193
        %v2288 = vadd.f32 %v1340, %v2195
        %v2289 = vadd.f32 %v1341, %v2279
        %v2290 = vadd.f32 %v1342, %v2281
        %2291 = vst [vmem:[#allocation2] sm:$0xff] %v2283
        %2292 = vst [vmem:[#allocation2 + $0x8] sm:$0xff] %v2284
        %2293 = vst [vmem:[#allocation2 + $0x10] sm:$0xff] %v2285
        %2294 = vst [vmem:[#allocation2 + $0x18] sm:$0xff] %v2286
        %2295 = vst [vmem:[#allocation2 + $0x20] sm:$0xff] %v2287
        %2296 = vst [vmem:[#allocation2 + $0x28] sm:$0xff] %v2288
        %2297 = vst [vmem:[#allocation2 + $0x30] sm:$0xff] %v2289
        %2298 = vst [vmem:[#allocation2 + $0x38] sm:$0xff] %v2290
        %p2299 = scmp.eq.s32.totalorder %s24, 3
        // Predicated region
        $region65: #{tpu_custom_call.1} parent=39 // pred_check
          %p2300 = pneg %p2299
        $region66: #{tpu_custom_call.1} parent=39 // pred_check_branch
          %2302 = sbr.rel (%p2300) target = $region68
        $region67: #{tpu_custom_call.1} parent=39 // pred_region
          %v2303 = vld [vmem:[#allocation2] sm:$0xff]
          %v2304 = vld [vmem:[#allocation2 + $0x8] sm:$0xff]
          %v2305 = vld [vmem:[#allocation2 + $0x10] sm:$0xff]
          %v2306 = vld [vmem:[#allocation2 + $0x18] sm:$0xff]
          %v2307 = vld [vmem:[#allocation2 + $0x20] sm:$0xff]
          %v2308 = vld [vmem:[#allocation2 + $0x28] sm:$0xff]
          %v2309 = vld [vmem:[#allocation2 + $0x30] sm:$0xff]
          %v2310 = vld [vmem:[#allocation2 + $0x38] sm:$0xff]
          %v2311 = vld [vmem:[#allocation11] sm:$0xf]
          %v2313 = vlaneseq
          %v2314 = vshrl.u32 %v2313, 7
          %v2315 = vsub.s32 0, %v2314
          %v2316 = vrot.slane %v2311, %v2315
          %v2317 = vlaneseq
          %v2318 = vshrl.u32 %v2317, 7
          %v2319 = vsub.s32 1, %v2318
          %v2320 = vrot.slane %v2311, %v2319
          %v2321 = vlaneseq
          %v2322 = vshrl.u32 %v2321, 7
          %v2323 = vsub.s32 2, %v2322
          %v2324 = vrot.slane %v2311, %v2323
          %v2325 = vlaneseq
          %v2326 = vshrl.u32 %v2325, 7
          %v2327 = vsub.s32 3, %v2326
          %v2328 = vrot.slane %v2311, %v2327
          %v2333 = vadd.f32 %v2303, %v2316
          %v2334 = vadd.f32 %v2304, %v2320
          %v2335 = vadd.f32 %v2305, %v2324
          %v2336 = vadd.f32 %v2306, %v2328
          %v2337 = vadd.f32 %v2307, %v2316
          %v2338 = vadd.f32 %v2308, %v2320
          %v2339 = vadd.f32 %v2309, %v2324
          %v2340 = vadd.f32 %v2310, %v2328
          %2341 = vst [vmem:[#allocation12] sm:$0xff] %v2333
          %2342 = vst [vmem:[#allocation12 + $0x8] sm:$0xff] %v2334
          %2343 = vst [vmem:[#allocation12 + $0x10] sm:$0xff] %v2335
          %2344 = vst [vmem:[#allocation12 + $0x18] sm:$0xff] %v2336
          %2345 = vst [vmem:[#allocation12 + $0x20] sm:$0xff] %v2337
          %2346 = vst [vmem:[#allocation12 + $0x28] sm:$0xff] %v2338
          %2347 = vst [vmem:[#allocation12 + $0x30] sm:$0xff] %v2339
          %2348 = vst [vmem:[#allocation12 + $0x38] sm:$0xff] %v2340
        $region68: #{tpu_custom_call.1} parent=39 // pred_fallthru
          _
        // Predicated region
        $region69: #{tpu_custom_call.1} parent=39 // pred_check
          %p2349 = pneg %p157
        $region70: #{tpu_custom_call.1} parent=39 // pred_check_branch
          %2351 = sbr.rel (%p2349) target = $region72
        $region71: #{tpu_custom_call.1} parent=39 // pred_region
          %s2353 = ssub.s32 1024, 1024
          %2354 = vsyncadd [#allocation5], %s2353
          %s2355 = sshll.u32 [#allocation12], 4
          %s2356 = int_to_ptr.vmem [resolvable:$true] %s2355
          %2361 = dma.vmem_to_hbm [thread:$0]  %s2356, 1024, %s5, [#allocation5], 512, 512, 32
        $region72: #{tpu_custom_call.1} parent=39 // pred_fallthru
          _
        // Predicated region
        $region73: #{tpu_custom_call.1} parent=39 // pred_check
          %p2362 = pneg %p157
        $region74: #{tpu_custom_call.1} parent=39 // pred_check_branch
          %2364 = sbr.rel (%p2362) target = $region76
        $region75: #{tpu_custom_call.1} parent=39 // pred_region
          %2365 = dma.done [#allocation5], 1024
        $region76: #{tpu_custom_call.1} parent=39 // pred_fallthru
          _
      $region40: #{tpu_custom_call.1} parent=5 // pred_fallthru
        _
      %p2366 = scmp.le.s32.totalorder 2, %s19
      // Predicated region
      $region77: #{tpu_custom_call.1} parent=5 // pred_check
        %p2367 = pneg %p2366
      $region78: #{tpu_custom_call.1} parent=5 // pred_check_branch
        %2369 = sbr.rel (%p2367) target = $region80
      $region79: #{tpu_custom_call.1} parent=5 // pred_region
        %s2370 = ssub.s32 %s19, 2
      $region80: #{tpu_custom_call.1} parent=5 // pred_fallthru
        _
    $region6: #{tpu_custom_call.1} parent=1 // loop_footer
      %s23 = sadd.s32 1, %s19
    $region7: #{tpu_custom_call.1} parent=1 // loop_footer_branch
      %18 = sbr.rel target = $region3
    $region8: #{tpu_custom_call.1} parent=1 // loop_exit
      _
    %2371 = vsyncpa [#allocation4], 1
    %s2372 = scalar_lea.sflag [#allocation4], 1
    %2373 = vsyncpa %s2372, 1
    %2374 = vsyncpa [#allocation7], 1
    %s2375 = scalar_lea.sflag [#allocation7], 1
    %2376 = vsyncpa %s2375, 1
    %2377 = vsyncpa [#allocation10], 1
    %s2378 = scalar_lea.sflag [#allocation10], 1
    %2379 = vsyncpa %s2378, 1
    %2380 = vsyncpa [#allocation5], 1
    %s2381 = scalar_lea.sflag [#allocation5], 1
    %2382 = vsyncpa %s2381, 1

</llo_original>
